<compile_context>
chip_gen: v6e
topology: v6e:2x2x1
jax: 0.10.0
libtpu: 0.0.40
codegen_flags: <defaults>
</compile_context>

<pallas_src>
import functools

import jax
import jax.numpy as jnp
from jax.experimental import pallas as pl
from jax.experimental.pallas import tpu as pltpu


C_PAD = 128      # channel dims zero-padded to one full lane width
LANE = 128
SUBLANE = 8


def _round_up(x, m):
    return -(-x // m) * m


# ----------------------------------------------------------------------------
# Fused kernel: embedding -> dilated causal conv stack -> ctx -> folded head
# ----------------------------------------------------------------------------
def _tcn_kernel(x_ref, yT_ref, ein_w_ref, ein_b_ref, conv_w_ref, conv_b_ref,
                ycomb_ref, ctxw_ref, bias_ref, out_ref, xbuf,
                *, B_blk, L_in, PAD, n_layers, K):
    M = B_blk * L_in

    # Causal zero-padding rows.  Re-zeroed every grid step: scratch persists
    # across steps and batch blocks may be split across cores on v7x.
    xbuf[:, 0:PAD, :] = jnp.zeros((B_blk, PAD, C_PAD), jnp.float32)

    # Input embedding: one MXU matmul with M = B_blk * L_in rows.
    x_emb = jnp.dot(x_ref[...], ein_w_ref[...],
                    preferred_element_type=jnp.float32) + ein_b_ref[...]
    xbuf[:, PAD:PAD + L_in, :] = x_emb.reshape(B_blk, L_in, C_PAD)

    # Dilated causal conv stack.  Each layer: im2col concat of the K shifted
    # slices along the channel (lane) axis, then ONE matmul with contraction
    # depth K*C_PAD, bias add and ReLU.
    for l in range(n_layers):
        dil = 2 ** l
        taps = []
        for j in range(K):
            shift = (K - 1 - j) * dil
            taps.append(xbuf[:, PAD - shift:PAD - shift + L_in, :])
        lhs = jnp.concatenate(taps, axis=-1).reshape(M, K * C_PAD)
        h = jnp.dot(lhs, conv_w_ref[l], preferred_element_type=jnp.float32)
        h = jnp.maximum(h + conv_b_ref[l], 0.0)
        xbuf[:, PAD:PAD + L_in, :] = h.reshape(B_blk, L_in, C_PAD)

    # ctx = final-layer activation at the last valid time step.  Its head
    # contribution is computed against lane-broadcast ctx weights so the MXU
    # result is already a (B_blk, L_out_pad) lane-dense tile.
    ctx = xbuf[:, PAD + L_in - 1:PAD + L_in, :].reshape(B_blk, C_PAD)
    ctx_term = jnp.dot(ctx, ctxw_ref[...], preferred_element_type=jnp.float32)

    # Target embedding + head folded host-side to w_comb (broadcast over the
    # output lane axis):  y_term[b, l] = sum_f yT[b, f, l] * w_comb[f].
    y_term = jnp.sum(yT_ref[...] * ycomb_ref[...][None, :, :], axis=1)

    out_ref[...] = y_term + ctx_term + bias_ref[...]


# ----------------------------------------------------------------------------
# Parameters (plain "torch-like" layout) and packing for the fused kernel
# ----------------------------------------------------------------------------
def _uniform(key, shape, fan_in):
    s = 1.0 / jnp.sqrt(jnp.float32(fan_in))
    return jax.random.uniform(key, shape, jnp.float32, -s, s)


def init_params(key, F_in, F_trg, d_in, d_emb, channels, kernel):
    n_layers = len(channels)
    ks = jax.random.split(key, 4 + 2 * n_layers + 2)
    p = {}
    # ModularEmbedding approximated as dense embeddings (see TODO above).
    p["ein_w"] = _uniform(ks[0], (F_in, d_in), F_in)
    p["ein_b"] = _uniform(ks[1], (d_in,), F_in)
    p["etr_w"] = _uniform(ks[2], (F_trg, d_emb), F_trg)
    p["etr_b"] = _uniform(ks[3], (d_emb,), F_trg)
    # Conv1d weights stored as (K, C_in, C_out).
    p["conv_w"], p["conv_b"] = [], []
    c_in = d_in
    for i, c_out in enumerate(channels):
        fan = c_in * kernel
        p["conv_w"].append(_uniform(ks[4 + 2 * i], (kernel, c_in, c_out), fan))
        p["conv_b"].append(_uniform(ks[5 + 2 * i], (c_out,), fan))
        c_in = c_out
    in_feats = channels[-1] + d_emb
    p["head_w"] = _uniform(ks[-2], (in_feats, 1), in_feats)
    p["head_b"] = _uniform(ks[-1], (1,), in_feats)
    return p


def _pad_to(a, shape):
    assert all(t >= s for s, t in zip(a.shape, shape))
    return jnp.pad(a, [(0, t - s) for s, t in zip(a.shape, shape)])


def pack_params(p, d_emb, kernel, L_out):
    """Pad channel dims to 128 lanes and lay weights out for the fused kernel."""
    d_in = p["ein_w"].shape[1]
    assert d_in <= C_PAD and all(w.shape[2] <= C_PAD for w in p["conv_w"]), \
        "channel widths above 128 lanes are not supported by this kernel"
    L_out_pad = _round_up(max(L_out, 1), LANE)

    packed = {}
    packed["ein_w"] = _pad_to(p["ein_w"], (p["ein_w"].shape[0], C_PAD))
    packed["ein_b"] = _pad_to(p["ein_b"], (C_PAD,)).reshape(1, C_PAD)

    # Conv weights packed for the fused im2col matmul: (n_layers, K*C_PAD, C_PAD).
    conv_w = [_pad_to(w, (kernel, C_PAD, C_PAD)).reshape(1, kernel * C_PAD, C_PAD)
              for w in p["conv_w"]]
    packed["conv_w"] = jnp.concatenate(conv_w, axis=0)
    conv_b = [_pad_to(b, (C_PAD,)).reshape(1, 1, C_PAD) for b in p["conv_b"]]
    packed["conv_b"] = jnp.concatenate(conv_b, axis=0)        # (n_layers, 1, 128)

    # Fold the target embedding into the head (exact algebra):
    #   out = y @ (etr_w @ w_y) + ctx @ w_c + (etr_b @ w_y + head_b)
    w_y = p["head_w"][:d_emb, 0]                              # (d_emb,)
    w_c = p["head_w"][d_emb:, 0]                              # (C_last,)
    w_comb = p["etr_w"] @ w_y                                 # (F_trg,)
    bias_total = p["etr_b"] @ w_y + p["head_b"][0]            # scalar

    packed["ycomb"] = jnp.broadcast_to(w_comb[:, None],
                                       (w_comb.shape[0], L_out_pad))
    packed["ctx_w"] = jnp.broadcast_to(_pad_to(w_c, (C_PAD,))[:, None],
                                       (C_PAD, L_out_pad))
    packed["bias"] = jnp.broadcast_to(jnp.reshape(bias_total, (1, 1)),
                                      (1, L_out_pad))
    return packed


# ----------------------------------------------------------------------------
# Forward wrapper: a single fused pallas_call over a batch-blocked grid
# ----------------------------------------------------------------------------
def _const_spec(a):
    zeros = (0,) * a.ndim
    return pl.BlockSpec(a.shape, lambda b, _z=zeros: _z)


@jax.jit
def tcn_forward(packed, X, y):
    B, L_in, F_in = X.shape
    _, L_out, F_trg = y.shape
    n_layers = packed["conv_b"].shape[0]
    K = packed["conv_w"].shape[1] // C_PAD
    L_out_pad = packed["ycomb"].shape[-1]
    assert L_out <= L_out_pad

    max_shift = (K - 1) * (2 ** (n_layers - 1))
    PAD = max(SUBLANE, _round_up(max_shift, SUBLANE))     # sublane-aligned left pad

    # Batch block: target MXU M = B_blk * L_in >= 256 (v6e/v7x; v5e only needs
    # 128), but keep >= 2 grid steps when B allows so both v7x TensorCores get
    # work on the "parallel" batch axis.
    b_blk = _round_up(max(1, -(-256 // L_in)), SUBLANE)
    if B <= b_blk:
        b_blk = _round_up(B, SUBLANE)
    elif B < 2 * b_blk:
        b_blk = _round_up(-(-B // 2), SUBLANE)
    B_pad = _round_up(B, b_blk)
    n_blocks = B_pad // b_blk

    # Host-side layout plumbing (all tiny): flatten X rows so the kernel sees a
    # 2-D (B_blk*L_in, F_in) matmul LHS, and keep y transposed + padded so the
    # head output is produced as lane-dense (B_blk, L_out_pad) tiles.
    Xp = jnp.pad(X, ((0, B_pad - B), (0, 0), (0, 0))).reshape(B_pad * L_in, F_in)
    yT = jnp.pad(jnp.swapaxes(y, 1, 2),
                 ((0, B_pad - B), (0, 0), (0, L_out_pad - L_out)))

    kern = functools.partial(_tcn_kernel, B_blk=b_blk, L_in=L_in, PAD=PAD,
                             n_layers=n_layers, K=K)

    out = pl.pallas_call(
        kern,
        grid=(n_blocks,),
        out_shape=jax.ShapeDtypeStruct((B_pad, L_out_pad), jnp.float32),
        in_specs=[
            pl.BlockSpec((b_blk * L_in, F_in), lambda b: (b, 0)),          # X rows
            pl.BlockSpec((b_blk, F_trg, L_out_pad), lambda b: (b, 0, 0)),  # y^T
            _const_spec(packed["ein_w"]),
            _const_spec(packed["ein_b"]),
            _const_spec(packed["conv_w"]),
            _const_spec(packed["conv_b"]),
            _const_spec(packed["ycomb"]),
            _const_spec(packed["ctx_w"]),
            _const_spec(packed["bias"]),
        ],
        out_specs=pl.BlockSpec((b_blk, L_out_pad), lambda b: (b, 0)),
        scratch_shapes=[pltpu.VMEM((b_blk, PAD + L_in, C_PAD), jnp.float32)],
        compiler_params=pltpu.CompilerParams(
            dimension_semantics=("parallel",),
            vmem_limit_bytes=32 * 1024 * 1024),
    )(Xp, yT, packed["ein_w"], packed["ein_b"], packed["conv_w"],
      packed["conv_b"], packed["ycomb"], packed["ctx_w"], packed["bias"])
    return out[:B, :L_out]


# ----------------------------------------------------------------------------
# Pure-JAX reference (direct translation of the PyTorch forward)
# ----------------------------------------------------------------------------
def tcn_reference(p, X, y, kernel):
    B, L_in, _ = X.shape
    L_out = y.shape[1]
    h = X @ p["ein_w"] + p["ein_b"]                       # (B, L_in, d_in)
    for l, (w, bb) in enumerate(zip(p["conv_w"], p["conv_b"])):
        dil = 2 ** l
        pad = (kernel - 1) * dil
        hp = jnp.pad(h, ((0, 0), (pad, 0), (0, 0)))
        acc = jnp.zeros((B, L_in, w.shape[2]), jnp.float32) + bb
        for j in range(kernel):
            shift = (kernel - 1 - j) * dil
            acc = acc + hp[:, pad - shift:pad - shift + L_in, :] @ w[j]
        h = jnp.maximum(acc, 0.0)
    ctx = h[:, L_in - 1, :]                               # (B, C_last)
    y_emb = y @ p["etr_w"] + p["etr_b"]                   # (B, L_out, d_emb)
    ctx_exp = jnp.broadcast_to(ctx[:, None, :], (B, L_out, ctx.shape[-1]))
    z = jnp.concatenate([y_emb, ctx_exp], axis=-1)
    return (z @ p["head_w"] + p["head_b"]).squeeze(-1)


if __name__ == "__main__":
    # Small but batch-blocked sizes: B=32, B_blk=16 -> 2 grid steps, MXU M=256.
    B, L_in, L_out = 32, 16, 8
    F_in, F_trg = 6, 6
    d_in, d_emb = 16, 16
    channels = [32, 32]
    kernel = 3

    key = jax.random.PRNGKey(0)
    k_p, k_x, k_y = jax.random.split(key, 3)
    params = init_params(k_p, F_in, F_trg, d_in, d_emb, channels, kernel)
    X = jax.random.normal(k_x, (B, L_in, F_in), jnp.float32)
    y = jax.random.normal(k_y, (B, L_out, F_trg), jnp.float32)

    packed = pack_params(params, d_emb, kernel, L_out)
    out = tcn_forward(packed, X, y)
    jax.block_until_ready(out)

    ref = tcn_reference(params, X, y, kernel)
    assert out.shape == (B, L_out), out.shape
    assert out.dtype == jnp.float32
    assert jnp.allclose(out, ref, rtol=1e-4, atol=1e-4), (out, ref)
    print("KERNEL_OK")
</pallas_src>

<mosaic_0001>
module attributes {stable_mosaic.version = 11 : i64} {
  func.func @_tcn_kernel(%arg0: i32, %arg1: memref<256x6xf32, #tpu.memory_space<vmem>>, %arg2: memref<16x6x128xf32, #tpu.memory_space<vmem>>, %arg3: memref<6x128xf32, #tpu.memory_space<vmem>>, %arg4: memref<1x128xf32, #tpu.memory_space<vmem>>, %arg5: memref<2x384x128xf32, #tpu.memory_space<vmem>>, %arg6: memref<2x1x128xf32, #tpu.memory_space<vmem>>, %arg7: memref<6x128xf32, #tpu.memory_space<vmem>>, %arg8: memref<128x128xf32, #tpu.memory_space<vmem>>, %arg9: memref<1x128xf32, #tpu.memory_space<vmem>>, %arg10: memref<16x128xf32, #tpu.memory_space<vmem>>, %arg11: memref<16x24x128xf32, #tpu.memory_space<vmem>>) attributes {dimension_semantics = [#tpu.dimension_semantics<parallel>], iteration_bounds = array<i64: 2>, scalar_prefetch = 0 : i64, scratch_operands = 1 : i64, tpu.core_type = #tpu.core_type<tc>, window_params = [{transform_indices = @transform_0, window_bounds = array<i64: 256, 6>}, {transform_indices = @transform_1, window_bounds = array<i64: 16, 6, 128>}, {pipeline_mode = #tpu.pipeline_mode<synchronous>, transform_indices = @transform_2, window_bounds = array<i64: 6, 128>}, {pipeline_mode = #tpu.pipeline_mode<synchronous>, transform_indices = @transform_3, window_bounds = array<i64: 1, 128>}, {pipeline_mode = #tpu.pipeline_mode<synchronous>, transform_indices = @transform_4, window_bounds = array<i64: 2, 384, 128>}, {pipeline_mode = #tpu.pipeline_mode<synchronous>, transform_indices = @transform_5, window_bounds = array<i64: 2, 1, 128>}, {pipeline_mode = #tpu.pipeline_mode<synchronous>, transform_indices = @transform_6, window_bounds = array<i64: 6, 128>}, {pipeline_mode = #tpu.pipeline_mode<synchronous>, transform_indices = @transform_7, window_bounds = array<i64: 128, 128>}, {pipeline_mode = #tpu.pipeline_mode<synchronous>, transform_indices = @transform_8, window_bounds = array<i64: 1, 128>}, {transform_indices = @transform_9, window_bounds = array<i64: 16, 128>}]} {
    %cst = arith.constant 0.000000e+00 : f32
    %0 = vector.broadcast %cst : f32 to vector<16x8x128xf32>
    %c0 = arith.constant 0 : index
    %c0_0 = arith.constant 0 : index
    %c0_1 = arith.constant 0 : index
    %1 = vector.load %arg11[%c0, %c0_0, %c0_1] : memref<16x24x128xf32, #tpu.memory_space<vmem>>, vector<16x8x128xf32>
    tpu.vector_store %arg11[%c0, %c0_0, %c0_1], %0 {strides = array<i32>} : memref<16x24x128xf32, #tpu.memory_space<vmem>>, vector<16x8x128xf32>,
    %c0_2 = arith.constant 0 : index
    %c0_3 = arith.constant 0 : index
    %2 = vector.load %arg1[%c0_2, %c0_3] : memref<256x6xf32, #tpu.memory_space<vmem>>, vector<256x6xf32>
    %c0_4 = arith.constant 0 : index
    %c0_5 = arith.constant 0 : index
    %3 = vector.load %arg3[%c0_4, %c0_5] : memref<6x128xf32, #tpu.memory_space<vmem>>, vector<6x128xf32>
    %cst_6 = arith.constant dense<0.000000e+00> : vector<256x128xf32>
    %4 = tpu.matmul %2, %3, %cst_6 {dimension_numbers = #tpu.dot_dimension_numbers<[1], [0], [0], [1], [0, 0, 1, 1], [], []>} : vector<256x6xf32>, vector<6x128xf32>, vector<256x128xf32> -> vector<256x128xf32>
    %c0_7 = arith.constant 0 : index
    %c0_8 = arith.constant 0 : index
    %5 = vector.load %arg4[%c0_7, %c0_8] : memref<1x128xf32, #tpu.memory_space<vmem>>, vector<1x128xf32>
    %6 = vector.broadcast %5 : vector<1x128xf32> to vector<256x128xf32>
    %7 = arith.addf %4, %6 : vector<256x128xf32>
    %8 = vector.shape_cast %7 : vector<256x128xf32> to vector<16x16x128xf32>
    %c0_9 = arith.constant 0 : index
    %c8 = arith.constant 8 : index
    %c0_10 = arith.constant 0 : index
    %9 = vector.load %arg11[%c0_9, %c8, %c0_10] : memref<16x24x128xf32, #tpu.memory_space<vmem>>, vector<16x16x128xf32>
    tpu.vector_store %arg11[%c0_9, %c8, %c0_10], %8 {strides = array<i32>} : memref<16x24x128xf32, #tpu.memory_space<vmem>>, vector<16x16x128xf32>,
    %c0_11 = arith.constant 0 : index
    %c6 = arith.constant 6 : index
    %c0_12 = arith.constant 0 : index
    %10 = vector.load %arg11[%c0_11, %c6, %c0_12] : memref<16x24x128xf32, #tpu.memory_space<vmem>>, vector<16x16x128xf32>
    %c0_13 = arith.constant 0 : index
    %c7 = arith.constant 7 : index
    %c0_14 = arith.constant 0 : index
    %11 = vector.load %arg11[%c0_13, %c7, %c0_14] : memref<16x24x128xf32, #tpu.memory_space<vmem>>, vector<16x16x128xf32>
    %c0_15 = arith.constant 0 : index
    %c8_16 = arith.constant 8 : index
    %c0_17 = arith.constant 0 : index
    %12 = vector.load %arg11[%c0_15, %c8_16, %c0_17] : memref<16x24x128xf32, #tpu.memory_space<vmem>>, vector<16x16x128xf32>
    %13 = tpu.concatenate %10, %11, %12 in 2 : vector<16x16x128xf32>, vector<16x16x128xf32>, vector<16x16x128xf32> -> vector<16x16x384xf32>
    %14 = vector.shape_cast %13 : vector<16x16x384xf32> to vector<256x384xf32>
    %c0_18 = arith.constant 0 : index
    %c0_19 = arith.constant 0 : index
    %c0_20 = arith.constant 0 : index
    %15 = vector.load %arg5[%c0_18, %c0_19, %c0_20] : memref<2x384x128xf32, #tpu.memory_space<vmem>>, vector<1x384x128xf32>
    %16 = vector.shape_cast %15 : vector<1x384x128xf32> to vector<384x128xf32>
    %cst_21 = arith.constant dense<0.000000e+00> : vector<256x128xf32>
    %17 = tpu.matmul %14, %16, %cst_21 {dimension_numbers = #tpu.dot_dimension_numbers<[1], [0], [0], [1], [0, 0, 1, 1], [], []>} : vector<256x384xf32>, vector<384x128xf32>, vector<256x128xf32> -> vector<256x128xf32>
    %c0_22 = arith.constant 0 : index
    %c0_23 = arith.constant 0 : index
    %c0_24 = arith.constant 0 : index
    %18 = vector.load %arg6[%c0_22, %c0_23, %c0_24] : memref<2x1x128xf32, #tpu.memory_space<vmem>>, vector<1x1x128xf32>
    %19 = vector.shape_cast %18 : vector<1x1x128xf32> to vector<1x128xf32>
    %20 = vector.broadcast %19 : vector<1x128xf32> to vector<256x128xf32>
    %21 = arith.addf %17, %20 : vector<256x128xf32>
    %cst_25 = arith.constant 0.000000e+00 : f32
    %22 = vector.broadcast %cst_25 : f32 to vector<256x128xf32>
    %23 = arith.maximumf %21, %22 : vector<256x128xf32>
    %24 = vector.shape_cast %23 : vector<256x128xf32> to vector<16x16x128xf32>
    %c0_26 = arith.constant 0 : index
    %c8_27 = arith.constant 8 : index
    %c0_28 = arith.constant 0 : index
    %25 = vector.load %arg11[%c0_26, %c8_27, %c0_28] : memref<16x24x128xf32, #tpu.memory_space<vmem>>, vector<16x16x128xf32>
    tpu.vector_store %arg11[%c0_26, %c8_27, %c0_28], %24 {strides = array<i32>} : memref<16x24x128xf32, #tpu.memory_space<vmem>>, vector<16x16x128xf32>,
    %c0_29 = arith.constant 0 : index
    %c4 = arith.constant 4 : index
    %c0_30 = arith.constant 0 : index
    %26 = vector.load %arg11[%c0_29, %c4, %c0_30] : memref<16x24x128xf32, #tpu.memory_space<vmem>>, vector<16x16x128xf32>
    %c0_31 = arith.constant 0 : index
    %c6_32 = arith.constant 6 : index
    %c0_33 = arith.constant 0 : index
    %27 = vector.load %arg11[%c0_31, %c6_32, %c0_33] : memref<16x24x128xf32, #tpu.memory_space<vmem>>, vector<16x16x128xf32>
    %c0_34 = arith.constant 0 : index
    %c8_35 = arith.constant 8 : index
    %c0_36 = arith.constant 0 : index
    %28 = vector.load %arg11[%c0_34, %c8_35, %c0_36] : memref<16x24x128xf32, #tpu.memory_space<vmem>>, vector<16x16x128xf32>
    %29 = tpu.concatenate %26, %27, %28 in 2 : vector<16x16x128xf32>, vector<16x16x128xf32>, vector<16x16x128xf32> -> vector<16x16x384xf32>
    %30 = vector.shape_cast %29 : vector<16x16x384xf32> to vector<256x384xf32>
    %c1 = arith.constant 1 : index
    %c0_37 = arith.constant 0 : index
    %c0_38 = arith.constant 0 : index
    %31 = vector.load %arg5[%c1, %c0_37, %c0_38] : memref<2x384x128xf32, #tpu.memory_space<vmem>>, vector<1x384x128xf32>
    %32 = vector.shape_cast %31 : vector<1x384x128xf32> to vector<384x128xf32>
    %cst_39 = arith.constant dense<0.000000e+00> : vector<256x128xf32>
    %33 = tpu.matmul %30, %32, %cst_39 {dimension_numbers = #tpu.dot_dimension_numbers<[1], [0], [0], [1], [0, 0, 1, 1], [], []>} : vector<256x384xf32>, vector<384x128xf32>, vector<256x128xf32> -> vector<256x128xf32>
    %c1_40 = arith.constant 1 : index
    %c0_41 = arith.constant 0 : index
    %c0_42 = arith.constant 0 : index
    %34 = vector.load %arg6[%c1_40, %c0_41, %c0_42] : memref<2x1x128xf32, #tpu.memory_space<vmem>>, vector<1x1x128xf32>
    %35 = vector.shape_cast %34 : vector<1x1x128xf32> to vector<1x128xf32>
    %36 = vector.broadcast %35 : vector<1x128xf32> to vector<256x128xf32>
    %37 = arith.addf %33, %36 : vector<256x128xf32>
    %cst_43 = arith.constant 0.000000e+00 : f32
    %38 = vector.broadcast %cst_43 : f32 to vector<256x128xf32>
    %39 = arith.maximumf %37, %38 : vector<256x128xf32>
    %40 = vector.shape_cast %39 : vector<256x128xf32> to vector<16x16x128xf32>
    %c0_44 = arith.constant 0 : index
    %c8_45 = arith.constant 8 : index
    %c0_46 = arith.constant 0 : index
    %41 = vector.load %arg11[%c0_44, %c8_45, %c0_46] : memref<16x24x128xf32, #tpu.memory_space<vmem>>, vector<16x16x128xf32>
    tpu.vector_store %arg11[%c0_44, %c8_45, %c0_46], %40 {strides = array<i32>} : memref<16x24x128xf32, #tpu.memory_space<vmem>>, vector<16x16x128xf32>,
    %c0_47 = arith.constant 0 : index
    %c23 = arith.constant 23 : index
    %c0_48 = arith.constant 0 : index
    %42 = vector.load %arg11[%c0_47, %c23, %c0_48] : memref<16x24x128xf32, #tpu.memory_space<vmem>>, vector<16x1x128xf32>
    %43 = vector.shape_cast %42 : vector<16x1x128xf32> to vector<16x128xf32>
    %c0_49 = arith.constant 0 : index
    %c0_50 = arith.constant 0 : index
    %44 = vector.load %arg8[%c0_49, %c0_50] : memref<128x128xf32, #tpu.memory_space<vmem>>, vector<128x128xf32>
    %cst_51 = arith.constant dense<0.000000e+00> : vector<16x128xf32>
    %45 = tpu.matmul %43, %44, %cst_51 {dimension_numbers = #tpu.dot_dimension_numbers<[1], [0], [0], [1], [0, 0, 1, 1], [], []>} : vector<16x128xf32>, vector<128x128xf32>, vector<16x128xf32> -> vector<16x128xf32>
    %c0_52 = arith.constant 0 : index
    %c0_53 = arith.constant 0 : index
    %c0_54 = arith.constant 0 : index
    %46 = vector.load %arg2[%c0_52, %c0_53, %c0_54] : memref<16x6x128xf32, #tpu.memory_space<vmem>>, vector<16x6x128xf32>
    %c0_55 = arith.constant 0 : index
    %c0_56 = arith.constant 0 : index
    %47 = vector.load %arg7[%c0_55, %c0_56] : memref<6x128xf32, #tpu.memory_space<vmem>>, vector<6x128xf32>
    %48 = vector.shape_cast %47 : vector<6x128xf32> to vector<1x6x128xf32>
    %49 = vector.broadcast %48 : vector<1x6x128xf32> to vector<16x6x128xf32>
    %50 = arith.mulf %46, %49 : vector<16x6x128xf32>
    %cst_57 = arith.constant dense<0.000000e+00> : vector<16x128xf32>
    %51 = vector.multi_reduction <add>, %50, %cst_57 [1] : vector<16x6x128xf32> to vector<16x128xf32>
    %52 = arith.addf %51, %45 : vector<16x128xf32>
    %c0_58 = arith.constant 0 : index
    %c0_59 = arith.constant 0 : index
    %53 = vector.load %arg9[%c0_58, %c0_59] : memref<1x128xf32, #tpu.memory_space<vmem>>, vector<1x128xf32>
    %54 = vector.broadcast %53 : vector<1x128xf32> to vector<16x128xf32>
    %55 = arith.addf %52, %54 : vector<16x128xf32>
    %c0_60 = arith.constant 0 : index
    %c0_61 = arith.constant 0 : index
    %56 = vector.load %arg10[%c0_60, %c0_61] : memref<16x128xf32, #tpu.memory_space<vmem>>, vector<16x128xf32>
    tpu.vector_store %arg10[%c0_60, %c0_61], %55 {strides = array<i32>} : memref<16x128xf32, #tpu.memory_space<vmem>>, vector<16x128xf32>,
    return
  }
  func.func @transform_0(%arg0: i32) -> (i32, i32) {
    %c0_i32 = arith.constant 0 : i32
    %c0_i32_0 = arith.constant 0 : i32
    return %arg0, %c0_i32 : i32, i32
  }
  func.func @transform_1(%arg0: i32) -> (i32, i32, i32) {
    %c0_i32 = arith.constant 0 : i32
    %c0_i32_0 = arith.constant 0 : i32
    %c0_i32_1 = arith.constant 0 : i32
    return %arg0, %c0_i32, %c0_i32_0 : i32, i32, i32
  }
  func.func @transform_2(%arg0: i32) -> (i32, i32) {
    %c0_i32 = arith.constant 0 : i32
    %c0_i32_0 = arith.constant 0 : i32
    %c0_i32_1 = arith.constant 0 : i32
    return %c0_i32, %c0_i32_0 : i32, i32
  }
  func.func @transform_3(%arg0: i32) -> (i32, i32) {
    %c0_i32 = arith.constant 0 : i32
    %c0_i32_0 = arith.constant 0 : i32
    %c0_i32_1 = arith.constant 0 : i32
    return %c0_i32, %c0_i32_0 : i32, i32
  }
  func.func @transform_4(%arg0: i32) -> (i32, i32, i32) {
    %c0_i32 = arith.constant 0 : i32
    %c0_i32_0 = arith.constant 0 : i32
    %c0_i32_1 = arith.constant 0 : i32
    %c0_i32_2 = arith.constant 0 : i32
    return %c0_i32, %c0_i32_0, %c0_i32_1 : i32, i32, i32
  }
  func.func @transform_5(%arg0: i32) -> (i32, i32, i32) {
    %c0_i32 = arith.constant 0 : i32
    %c0_i32_0 = arith.constant 0 : i32
    %c0_i32_1 = arith.constant 0 : i32
    %c0_i32_2 = arith.constant 0 : i32
    return %c0_i32, %c0_i32_0, %c0_i32_1 : i32, i32, i32
  }
  func.func @transform_6(%arg0: i32) -> (i32, i32) {
    %c0_i32 = arith.constant 0 : i32
    %c0_i32_0 = arith.constant 0 : i32
    %c0_i32_1 = arith.constant 0 : i32
    return %c0_i32, %c0_i32_0 : i32, i32
  }
  func.func @transform_7(%arg0: i32) -> (i32, i32) {
    %c0_i32 = arith.constant 0 : i32
    %c0_i32_0 = arith.constant 0 : i32
    %c0_i32_1 = arith.constant 0 : i32
    return %c0_i32, %c0_i32_0 : i32, i32
  }
  func.func @transform_8(%arg0: i32) -> (i32, i32) {
    %c0_i32 = arith.constant 0 : i32
    %c0_i32_0 = arith.constant 0 : i32
    %c0_i32_1 = arith.constant 0 : i32
    return %c0_i32, %c0_i32_0 : i32, i32
  }
  func.func @transform_9(%arg0: i32) -> (i32, i32) {
    %c0_i32 = arith.constant 0 : i32
    %c0_i32_0 = arith.constant 0 : i32
    return %arg0, %c0_i32 : i32, i32
  }
}

</mosaic_0001>

<llo_original>
// kernel: tcn_forward.1
$region0: #{tcn_forward.1}
  #allocation0 [shape = 'u32[]', space=smem, size = 0x4, offset = 0x4, fixed_abs, tag = 'smem constant byte address 0x4 - core index']
  #allocation1 [shape = 'u32[144,128]{1,0:T(1,128)}', space=vmem, size = 0x12000, scoped, tag = 'internal scratch']
  #allocation2 [shape = 'f32[16,24,128]{2,1,0:T(8,128)}', space=vmem, size = 0x30000, scoped, tag = 'scratch operand']
  %s0 = inlined_call_operand.vmem [shape: f32[512,6], index: 0, kind: input, shape index: {}]
  %s1 = inlined_call_operand.vmem [shape: f32[32,6,128], index: 1, kind: input, shape index: {}]
  %s2 = inlined_call_operand.vmem [shape: f32[6,128], index: 2, kind: input, shape index: {}]
  %s3 = inlined_call_operand.vmem [shape: f32[1,128], index: 3, kind: input, shape index: {}]
  %s4 = inlined_call_operand.vmem [shape: f32[2,384,128], index: 4, kind: input, shape index: {}]
  %s5 = inlined_call_operand.vmem [shape: f32[2,1,128], index: 5, kind: input, shape index: {}]
  %s6 = inlined_call_operand.vmem [shape: f32[6,128], index: 6, kind: input, shape index: {}]
  %s7 = inlined_call_operand.vmem [shape: f32[128,128], index: 7, kind: input, shape index: {}]
  %s8 = inlined_call_operand.vmem [shape: f32[1,128], index: 8, kind: input, shape index: {}]
  %s9 = inlined_call_operand.vmem [shape: f32[32,128], index: 9, kind: output, shape index: {}]
  %s10 = sld [smem:[#allocation0]]
  $region69: #{tcn_forward.1} parent=0
    _
  %s12 = ssub.s32 1, %s10
  %s13 = scalar_select 0, %s12, %s10
  loop: start=0, step=1, limit=4
  $region2: #{tcn_forward.1} parent=0 // loop_pre_header
    _
  $region3: #{tcn_forward.1} parent=0 // loop_header
    %s15 = sphi 0, %s19
    %p16 = scmp.ge.s32.totalorder %s15, 4
    %s25 = sphi 0, %s27
    %s28 = sphi 0, %s25
    %s29 = sphi 0, %s28
    %s45 = sphi 0, %s29
    %s51 = sphi 0, %s53
    %s54 = sphi 0, %s51
    %s55 = sphi 0, %s54
    %s71 = sphi 0, %s55
    %s75 = sphi 0, %s75
    %s77 = sphi 0, %s75
    %s78 = sphi 0, %s77
    %s92 = sphi 0, %s78
    %s96 = sphi 0, %s96
    %s98 = sphi 0, %s96
    %s99 = sphi 0, %s98
    %s113 = sphi 0, %s99
    %s117 = sphi 0, %s117
    %s119 = sphi 0, %s117
    %s120 = sphi 0, %s119
    %s134 = sphi 0, %s120
    %s138 = sphi 0, %s138
    %s140 = sphi 0, %s138
    %s141 = sphi 0, %s140
    %s155 = sphi 0, %s141
    %s159 = sphi 0, %s159
    %s161 = sphi 0, %s159
    %s162 = sphi 0, %s161
    %s176 = sphi 0, %s162
    %s180 = sphi 0, %s180
    %s182 = sphi 0, %s180
    %s183 = sphi 0, %s182
    %s197 = sphi 0, %s183
    %s201 = sphi 0, %s201
    %s203 = sphi 0, %s201
    %s204 = sphi 0, %s203
    %s218 = sphi 0, %s204
    %s224 = sphi 0, %s226
    %s227 = sphi 0, %s224
    %s228 = sphi 0, %s227
    %s244 = sphi 0, %s228
  $region4: #{tcn_forward.1} parent=0 // loop_header_branch
    %18 = sbr.rel (%p16) target = $region8
  $region5: #{tcn_forward.1} parent=0 // loop_body
    %s20 = ssub.s32 %s15, 1
    %s21 = ssub.s32 %s15, 2
    %s22 = sadd.s32 %s15, 1
    %s23 = ssub.s32 %s15, %s22
    %p24 = scmp.eq.s32.totalorder %s23, 0
    %s26 = sadd.s32 %s25, 1
    %s27 = scalar_select %p24, %s25, %s26
    %p30 = pneg %p24
    %p31 = scmp.eq.s32.totalorder %s15, 1
    %p32 = por %p30, %p31
    %p33 = scmp.ne.s32.totalorder %s25, %s28
    %p34 = scmp.eq.s32.totalorder %s15, 0
    %p35 = por %p33, %p34
    %p36 = scmp.ne.s32.totalorder %s25, %s28
    %p37 = scmp.eq.s32.totalorder %s20, 1
    %p38 = por %p36, %p37
    %p39 = scmp.ne.s32.totalorder %s28, %s29
    %p40 = scmp.eq.s32.totalorder %s20, 0
    %p41 = por %p39, %p40
    %p42 = scmp.ne.s32.totalorder %s28, %s29
    %p43 = scmp.eq.s32.totalorder %s21, 1
    %p44 = por %p42, %p43
    %p46 = scmp.ne.s32.totalorder %s29, %s45
    %p47 = scmp.eq.s32.totalorder %s21, 0
    %p48 = por %p46, %p47
    %s49 = ssub.s32 %s15, %s22
    %p50 = scmp.eq.s32.totalorder %s49, 0
    %s52 = sadd.s32 %s51, 1
    %s53 = scalar_select %p50, %s51, %s52
    %p56 = pneg %p50
    %p57 = scmp.eq.s32.totalorder %s15, 1
    %p58 = por %p56, %p57
    %p59 = scmp.ne.s32.totalorder %s51, %s54
    %p60 = scmp.eq.s32.totalorder %s15, 0
    %p61 = por %p59, %p60
    %p62 = scmp.ne.s32.totalorder %s51, %s54
    %p63 = scmp.eq.s32.totalorder %s20, 1
    %p64 = por %p62, %p63
    %p65 = scmp.ne.s32.totalorder %s54, %s55
    %p66 = scmp.eq.s32.totalorder %s20, 0
    %p67 = por %p65, %p66
    %p68 = scmp.ne.s32.totalorder %s54, %s55
    %p69 = scmp.eq.s32.totalorder %s21, 1
    %p70 = por %p68, %p69
    %p72 = scmp.ne.s32.totalorder %s55, %s71
    %p73 = scmp.eq.s32.totalorder %s21, 0
    %p74 = por %p72, %p73
    %s76 = sadd.s32 %s75, 1
    %p79 = scmp.eq.s32.totalorder %s15, 1
    %p80 = scmp.ne.s32.totalorder %s75, %s77
    %p81 = scmp.eq.s32.totalorder %s15, 0
    %p82 = por %p80, %p81
    %p83 = scmp.ne.s32.totalorder %s75, %s77
    %p84 = scmp.eq.s32.totalorder %s20, 1
    %p85 = por %p83, %p84
    %p86 = scmp.ne.s32.totalorder %s77, %s78
    %p87 = scmp.eq.s32.totalorder %s20, 0
    %p88 = por %p86, %p87
    %p89 = scmp.ne.s32.totalorder %s77, %s78
    %p90 = scmp.eq.s32.totalorder %s21, 1
    %p91 = por %p89, %p90
    %p93 = scmp.ne.s32.totalorder %s78, %s92
    %p94 = scmp.eq.s32.totalorder %s21, 0
    %p95 = por %p93, %p94
    %s97 = sadd.s32 %s96, 1
    %p100 = scmp.eq.s32.totalorder %s15, 1
    %p101 = scmp.ne.s32.totalorder %s96, %s98
    %p102 = scmp.eq.s32.totalorder %s15, 0
    %p103 = por %p101, %p102
    %p104 = scmp.ne.s32.totalorder %s96, %s98
    %p105 = scmp.eq.s32.totalorder %s20, 1
    %p106 = por %p104, %p105
    %p107 = scmp.ne.s32.totalorder %s98, %s99
    %p108 = scmp.eq.s32.totalorder %s20, 0
    %p109 = por %p107, %p108
    %p110 = scmp.ne.s32.totalorder %s98, %s99
    %p111 = scmp.eq.s32.totalorder %s21, 1
    %p112 = por %p110, %p111
    %p114 = scmp.ne.s32.totalorder %s99, %s113
    %p115 = scmp.eq.s32.totalorder %s21, 0
    %p116 = por %p114, %p115
    %s118 = sadd.s32 %s117, 1
    %p121 = scmp.eq.s32.totalorder %s15, 1
    %p122 = scmp.ne.s32.totalorder %s117, %s119
    %p123 = scmp.eq.s32.totalorder %s15, 0
    %p124 = por %p122, %p123
    %p125 = scmp.ne.s32.totalorder %s117, %s119
    %p126 = scmp.eq.s32.totalorder %s20, 1
    %p127 = por %p125, %p126
    %p128 = scmp.ne.s32.totalorder %s119, %s120
    %p129 = scmp.eq.s32.totalorder %s20, 0
    %p130 = por %p128, %p129
    %p131 = scmp.ne.s32.totalorder %s119, %s120
    %p132 = scmp.eq.s32.totalorder %s21, 1
    %p133 = por %p131, %p132
    %p135 = scmp.ne.s32.totalorder %s120, %s134
    %p136 = scmp.eq.s32.totalorder %s21, 0
    %p137 = por %p135, %p136
    %s139 = sadd.s32 %s138, 1
    %p142 = scmp.eq.s32.totalorder %s15, 1
    %p143 = scmp.ne.s32.totalorder %s138, %s140
    %p144 = scmp.eq.s32.totalorder %s15, 0
    %p145 = por %p143, %p144
    %p146 = scmp.ne.s32.totalorder %s138, %s140
    %p147 = scmp.eq.s32.totalorder %s20, 1
    %p148 = por %p146, %p147
    %p149 = scmp.ne.s32.totalorder %s140, %s141
    %p150 = scmp.eq.s32.totalorder %s20, 0
    %p151 = por %p149, %p150
    %p152 = scmp.ne.s32.totalorder %s140, %s141
    %p153 = scmp.eq.s32.totalorder %s21, 1
    %p154 = por %p152, %p153
    %p156 = scmp.ne.s32.totalorder %s141, %s155
    %p157 = scmp.eq.s32.totalorder %s21, 0
    %p158 = por %p156, %p157
    %s160 = sadd.s32 %s159, 1
    %p163 = scmp.eq.s32.totalorder %s15, 1
    %p164 = scmp.ne.s32.totalorder %s159, %s161
    %p165 = scmp.eq.s32.totalorder %s15, 0
    %p166 = por %p164, %p165
    %p167 = scmp.ne.s32.totalorder %s159, %s161
    %p168 = scmp.eq.s32.totalorder %s20, 1
    %p169 = por %p167, %p168
    %p170 = scmp.ne.s32.totalorder %s161, %s162
    %p171 = scmp.eq.s32.totalorder %s20, 0
    %p172 = por %p170, %p171
    %p173 = scmp.ne.s32.totalorder %s161, %s162
    %p174 = scmp.eq.s32.totalorder %s21, 1
    %p175 = por %p173, %p174
    %p177 = scmp.ne.s32.totalorder %s162, %s176
    %p178 = scmp.eq.s32.totalorder %s21, 0
    %p179 = por %p177, %p178
    %s181 = sadd.s32 %s180, 1
    %p184 = scmp.eq.s32.totalorder %s15, 1
    %p185 = scmp.ne.s32.totalorder %s180, %s182
    %p186 = scmp.eq.s32.totalorder %s15, 0
    %p187 = por %p185, %p186
    %p188 = scmp.ne.s32.totalorder %s180, %s182
    %p189 = scmp.eq.s32.totalorder %s20, 1
    %p190 = por %p188, %p189
    %p191 = scmp.ne.s32.totalorder %s182, %s183
    %p192 = scmp.eq.s32.totalorder %s20, 0
    %p193 = por %p191, %p192
    %p194 = scmp.ne.s32.totalorder %s182, %s183
    %p195 = scmp.eq.s32.totalorder %s21, 1
    %p196 = por %p194, %p195
    %p198 = scmp.ne.s32.totalorder %s183, %s197
    %p199 = scmp.eq.s32.totalorder %s21, 0
    %p200 = por %p198, %p199
    %s202 = sadd.s32 %s201, 1
    %p205 = scmp.eq.s32.totalorder %s15, 1
    %p206 = scmp.ne.s32.totalorder %s201, %s203
    %p207 = scmp.eq.s32.totalorder %s15, 0
    %p208 = por %p206, %p207
    %p209 = scmp.ne.s32.totalorder %s201, %s203
    %p210 = scmp.eq.s32.totalorder %s20, 1
    %p211 = por %p209, %p210
    %p212 = scmp.ne.s32.totalorder %s203, %s204
    %p213 = scmp.eq.s32.totalorder %s20, 0
    %p214 = por %p212, %p213
    %p215 = scmp.ne.s32.totalorder %s203, %s204
    %p216 = scmp.eq.s32.totalorder %s21, 1
    %p217 = por %p215, %p216
    %p219 = scmp.ne.s32.totalorder %s204, %s218
    %p220 = scmp.eq.s32.totalorder %s21, 0
    %p221 = por %p219, %p220
    %s222 = ssub.s32 %s15, %s22
    %p223 = scmp.eq.s32.totalorder %s222, 0
    %s225 = sadd.s32 %s224, 1
    %s226 = scalar_select %p223, %s224, %s225
    %p229 = pneg %p223
    %p230 = scmp.eq.s32.totalorder %s15, 1
    %p231 = por %p229, %p230
    %p232 = scmp.ne.s32.totalorder %s224, %s227
    %p233 = scmp.eq.s32.totalorder %s15, 0
    %p234 = por %p232, %p233
    %p235 = scmp.ne.s32.totalorder %s224, %s227
    %p236 = scmp.eq.s32.totalorder %s20, 1
    %p237 = por %p235, %p236
    %p238 = scmp.ne.s32.totalorder %s227, %s228
    %p239 = scmp.eq.s32.totalorder %s20, 0
    %p240 = por %p238, %p239
    %p241 = scmp.ne.s32.totalorder %s227, %s228
    %p242 = scmp.eq.s32.totalorder %s21, 1
    %p243 = por %p241, %p242
    %p245 = scmp.ne.s32.totalorder %s228, %s244
    %p246 = scmp.eq.s32.totalorder %s21, 0
    %p247 = por %p245, %p246
    %p248 = scmp.le.s32.totalorder 1, %s15
    %p249 = scmp.lt.s32.totalorder %s15, 3
    %p250 = pnand %p248, %p249
    %p251 = pneg %p250
    // Predicated region
    $region9: #{tcn_forward.1} parent=5 // pred_check
      _
    $region10: #{tcn_forward.1} parent=5 // pred_check_branch
      %253 = sbr.rel (%p250) target = $region12
    $region11: #{tcn_forward.1} parent=5 // pred_region
      %s254 = ssub.s32 %s15, 1
      // Predicated region
      $region13: #{tcn_forward.1} parent=11 // pred_check
        %p255 = pneg %p88
      $region14: #{tcn_forward.1} parent=11 // pred_check_branch
        %257 = sbr.rel (%p255) target = $region16
      $region15: #{tcn_forward.1} parent=11 // pred_region
        _
      $region16: #{tcn_forward.1} parent=11 // pred_fallthru
        _
      // Predicated region
      $region17: #{tcn_forward.1} parent=11 // pred_check
        %p258 = pneg %p109
      $region18: #{tcn_forward.1} parent=11 // pred_check_branch
        %260 = sbr.rel (%p258) target = $region20
      $region19: #{tcn_forward.1} parent=11 // pred_region
        _
      $region20: #{tcn_forward.1} parent=11 // pred_fallthru
        _
      // Predicated region
      $region21: #{tcn_forward.1} parent=11 // pred_check
        %p261 = pneg %p130
      $region22: #{tcn_forward.1} parent=11 // pred_check_branch
        %263 = sbr.rel (%p261) target = $region24
      $region23: #{tcn_forward.1} parent=11 // pred_region
        _
      $region24: #{tcn_forward.1} parent=11 // pred_fallthru
        _
      // Predicated region
      $region25: #{tcn_forward.1} parent=11 // pred_check
        %p264 = pneg %p151
      $region26: #{tcn_forward.1} parent=11 // pred_check_branch
        %266 = sbr.rel (%p264) target = $region28
      $region27: #{tcn_forward.1} parent=11 // pred_region
        _
      $region28: #{tcn_forward.1} parent=11 // pred_fallthru
        _
      // Predicated region
      $region29: #{tcn_forward.1} parent=11 // pred_check
        %p267 = pneg %p172
      $region30: #{tcn_forward.1} parent=11 // pred_check_branch
        %269 = sbr.rel (%p267) target = $region32
      $region31: #{tcn_forward.1} parent=11 // pred_region
        _
      $region32: #{tcn_forward.1} parent=11 // pred_fallthru
        _
      // Predicated region
      $region33: #{tcn_forward.1} parent=11 // pred_check
        %p270 = pneg %p193
      $region34: #{tcn_forward.1} parent=11 // pred_check_branch
        %272 = sbr.rel (%p270) target = $region36
      $region35: #{tcn_forward.1} parent=11 // pred_region
        _
      $region36: #{tcn_forward.1} parent=11 // pred_fallthru
        _
      // Predicated region
      $region37: #{tcn_forward.1} parent=11 // pred_check
        %p273 = pneg %p214
      $region38: #{tcn_forward.1} parent=11 // pred_check_branch
        %275 = sbr.rel (%p273) target = $region40
      $region39: #{tcn_forward.1} parent=11 // pred_region
        _
      $region40: #{tcn_forward.1} parent=11 // pred_fallthru
        _
    $region12: #{tcn_forward.1} parent=5 // pred_fallthru
      _
    %p276 = scmp.lt.s32.totalorder %s15, 2
    // Predicated region
    $region41: #{tcn_forward.1} parent=5 // pred_check
      %p277 = pneg %p276
    $region42: #{tcn_forward.1} parent=5 // pred_check_branch
      %279 = sbr.rel (%p277) target = $region44
    $region43: #{tcn_forward.1} parent=5 // pred_region
      // Predicated region
      $region45: #{tcn_forward.1} parent=43 // pred_check
        %p280 = pneg %p35
      $region46: #{tcn_forward.1} parent=43 // pred_check_branch
        %282 = sbr.rel (%p280) target = $region48
      $region47: #{tcn_forward.1} parent=43 // pred_region
        %s283 = smul.u32 32, %s15
        %p284 = scmp.lt.s32.totalorder %s283, 63
        %s285 = scalar_select %p284, %s283, 63
        %s286 = smul.addr %s285, 8
        %s287 = scalar_lea.vmem %s0, %s286
        %s288 = smul.u32 32, %s15
      $region48: #{tcn_forward.1} parent=43 // pred_fallthru
        _
      // Predicated region
      $region49: #{tcn_forward.1} parent=43 // pred_check
        %p289 = pneg %p61
      $region50: #{tcn_forward.1} parent=43 // pred_check_branch
        %291 = sbr.rel (%p289) target = $region52
      $region51: #{tcn_forward.1} parent=43 // pred_region
        %s292 = smul.u32 16, %s15
        %p293 = scmp.lt.s32.totalorder %s292, 31
        %s294 = scalar_select %p293, %s292, 31
        %s295 = smul.addr %s294, 8
        %s296 = scalar_lea.vmem %s1, %s295
        %s297 = smul.u32 16, %s15
      $region52: #{tcn_forward.1} parent=43 // pred_fallthru
        _
    $region44: #{tcn_forward.1} parent=5 // pred_fallthru
      _
    %p298 = scmp.le.s32.totalorder 1, %s15
    %p299 = scmp.lt.s32.totalorder %s15, 3
    %p300 = pnand %p298, %p299
    %p301 = pneg %p300
    // Predicated region
    $region53: #{tcn_forward.1} parent=5 // pred_check
      _
    $region54: #{tcn_forward.1} parent=5 // pred_check_branch
      %303 = sbr.rel (%p300) target = $region56
    $region55: #{tcn_forward.1} parent=5 // pred_region
      %s304 = ssub.s32 %s15, 1
      %s305 = smul.u32 32, %s20
      %p306 = scmp.lt.s32.totalorder %s305, 63
      %s307 = scalar_select %p306, %s305, 63
      %s308 = smul.addr %s307, 8
      %s309 = scalar_lea.vmem %s0, %s308
      %p310 = pneg %p41
      %p311 = pneg %p38
      %s312 = smul.u32 16, %s20
      %p313 = scmp.lt.s32.totalorder %s312, 31
      %s314 = scalar_select %p313, %s312, 31
      %s315 = smul.addr %s314, 8
      %s316 = scalar_lea.vmem %s1, %s315
      %p317 = pneg %p67
      %p318 = pneg %p64
      %p319 = pneg %p88
      %p320 = pneg %p85
      %p321 = pneg %p109
      %p322 = pneg %p106
      %p323 = pneg %p130
      %p324 = pneg %p127
      %p325 = pneg %p151
      %p326 = pneg %p148
      %p327 = pneg %p172
      %p328 = pneg %p169
      %p329 = pneg %p193
      %p330 = pneg %p190
      %p331 = pneg %p214
      %p332 = pneg %p211
      %p333 = pneg %p240
      %p334 = pneg %p237
      %s335 = smul.u32 2, %s20
      %p336 = scmp.lt.s32.totalorder %s335, 3
      %s337 = scalar_select %p336, %s335, 3
      %s338 = smul.addr %s337, 8
      %s339 = scalar_lea.vmem %s9, %s338
      %s340 = smul.u32 32, %s20
      %p341 = scmp.lt.s32.totalorder %s340, 63
      %s342 = scalar_select %p341, %s340, 63
      %s343 = smul.addr %s342, 8
      %s344 = scalar_lea.vmem %s0, %s343
      %s345 = smul.u32 32, %s20
      %s346 = smul.u32 16, %s20
      %p347 = scmp.lt.s32.totalorder %s346, 31
      %s348 = scalar_select %p347, %s346, 31
      %s349 = smul.addr %s348, 8
      %s350 = scalar_lea.vmem %s1, %s349
      %s351 = smul.u32 16, %s20
      %s352 = smul.u32 2, %s20
      %p353 = scmp.lt.s32.totalorder %s352, 3
      %s354 = scalar_select %p353, %s352, 3
      %s355 = smul.addr %s354, 8
      %s356 = scalar_lea.vmem %s9, %s355
      %s357 = smul.u32 2, %s20
      %358 = vst [vmem:[#allocation2] sm:$0xff] 0.0
      %359 = vst [vmem:[#allocation2 + $0x18] sm:$0xff] 0.0
      %360 = vst [vmem:[#allocation2 + $0x30] sm:$0xff] 0.0
      %361 = vst [vmem:[#allocation2 + $0x48] sm:$0xff] 0.0
      %362 = vst [vmem:[#allocation2 + $0x60] sm:$0xff] 0.0
      %363 = vst [vmem:[#allocation2 + $0x78] sm:$0xff] 0.0
      %364 = vst [vmem:[#allocation2 + $0x90] sm:$0xff] 0.0
      %365 = vst [vmem:[#allocation2 + $0xa8] sm:$0xff] 0.0
      %366 = vst [vmem:[#allocation2 + $0xc0] sm:$0xff] 0.0
      %367 = vst [vmem:[#allocation2 + $0xd8] sm:$0xff] 0.0
      %368 = vst [vmem:[#allocation2 + $0xf0] sm:$0xff] 0.0
      %369 = vst [vmem:[#allocation2 + $0x108] sm:$0xff] 0.0
      %370 = vst [vmem:[#allocation2 + $0x120] sm:$0xff] 0.0
      %371 = vst [vmem:[#allocation2 + $0x138] sm:$0xff] 0.0
      %372 = vst [vmem:[#allocation2 + $0x150] sm:$0xff] 0.0
      %373 = vst [vmem:[#allocation2 + $0x168] sm:$0xff] 0.0
      %v374 = vld [vmem:[%s344] sm:$0xff]
      %v375 = vld [vmem:[%s344 + $0x8] sm:$0xff]
      %v376 = vld [vmem:[%s344 + $0x10] sm:$0xff]
      %v377 = vld [vmem:[%s344 + $0x18] sm:$0xff]
      %v378 = vld [vmem:[%s344 + $0x20] sm:$0xff]
      %v379 = vld [vmem:[%s344 + $0x28] sm:$0xff]
      %v380 = vld [vmem:[%s344 + $0x30] sm:$0xff]
      %v381 = vld [vmem:[%s344 + $0x38] sm:$0xff]
      %v382 = vld [vmem:[%s344 + $0x40] sm:$0xff]
      %v383 = vld [vmem:[%s344 + $0x48] sm:$0xff]
      %v384 = vld [vmem:[%s344 + $0x50] sm:$0xff]
      %v385 = vld [vmem:[%s344 + $0x58] sm:$0xff]
      %v386 = vld [vmem:[%s344 + $0x60] sm:$0xff]
      %v387 = vld [vmem:[%s344 + $0x68] sm:$0xff]
      %v388 = vld [vmem:[%s344 + $0x70] sm:$0xff]
      %v389 = vld [vmem:[%s344 + $0x78] sm:$0xff]
      %v390 = vld [vmem:[%s344 + $0x80] sm:$0xff]
      %v391 = vld [vmem:[%s344 + $0x88] sm:$0xff]
      %v392 = vld [vmem:[%s344 + $0x90] sm:$0xff]
      %v393 = vld [vmem:[%s344 + $0x98] sm:$0xff]
      %v394 = vld [vmem:[%s344 + $0xa0] sm:$0xff]
      %v395 = vld [vmem:[%s344 + $0xa8] sm:$0xff]
      %v396 = vld [vmem:[%s344 + $0xb0] sm:$0xff]
      %v397 = vld [vmem:[%s344 + $0xb8] sm:$0xff]
      %v398 = vld [vmem:[%s344 + $0xc0] sm:$0xff]
      %v399 = vld [vmem:[%s344 + $0xc8] sm:$0xff]
      %v400 = vld [vmem:[%s344 + $0xd0] sm:$0xff]
      %v401 = vld [vmem:[%s344 + $0xd8] sm:$0xff]
      %v402 = vld [vmem:[%s344 + $0xe0] sm:$0xff]
      %v403 = vld [vmem:[%s344 + $0xe8] sm:$0xff]
      %v404 = vld [vmem:[%s344 + $0xf0] sm:$0xff]
      %v405 = vld [vmem:[%s344 + $0xf8] sm:$0xff]
      %v406 = vld [vmem:[%s2] sm:$0x3f]
      %v407 = vld [vmem:[%s3] sm:$0x1]
      %v409 = vlaneseq
      %v410 = vshrl.u32 %v409, 7
      %v411 = vsub.s32 0, %v410
      %v412 = vrot.slane %v407, %v411
      %vm414 = vcmask 48128
      %v416 = vsel %vm414, %v374, 0
      %v419 = vsel %vm414, %v375, 0
      %v422 = vsel %vm414, %v376, 0
      %v425 = vsel %vm414, %v377, 0
      %v428 = vsel %vm414, %v378, 0
      %v431 = vsel %vm414, %v379, 0
      %v434 = vsel %vm414, %v380, 0
      %v437 = vsel %vm414, %v381, 0
      %v440 = vsel %vm414, %v382, 0
      %v443 = vsel %vm414, %v383, 0
      %v446 = vsel %vm414, %v384, 0
      %v449 = vsel %vm414, %v385, 0
      %v452 = vsel %vm414, %v386, 0
      %v455 = vsel %vm414, %v387, 0
      %v458 = vsel %vm414, %v388, 0
      %v461 = vsel %vm414, %v389, 0
      %v464 = vsel %vm414, %v390, 0
      %v467 = vsel %vm414, %v391, 0
      %v470 = vsel %vm414, %v392, 0
      %v473 = vsel %vm414, %v393, 0
      %v476 = vsel %vm414, %v394, 0
      %v479 = vsel %vm414, %v395, 0
      %v482 = vsel %vm414, %v396, 0
      %v485 = vsel %vm414, %v397, 0
      %v488 = vsel %vm414, %v398, 0
      %v491 = vsel %vm414, %v399, 0
      %v494 = vsel %vm414, %v400, 0
      %v497 = vsel %vm414, %v401, 0
      %v500 = vsel %vm414, %v402, 0
      %v503 = vsel %vm414, %v403, 0
      %v506 = vsel %vm414, %v404, 0
      %v509 = vsel %vm414, %v405, 0
      %vm511 = vcmask 1045504
      %v513 = vsel %vm511, %v406, 0
      %515 = vmatprep.subr.mxu0 0.0
      %516 = vmatpush1.msra.mxu0 0.0
      %517 = vmatprep.subr.mxu0 0.0
      %518 = vmatpush1.msra.mxu0 0.0
      %519 = vmatprep.subr.mxu0 0.0
      %520 = vmatpush1.msra.mxu0 0.0
      %521 = vmatprep.subr.mxu0 0.0
      %522 = vmatpush1.msra.mxu0 0.0
      %523 = vmatprep.subr.mxu0 0.0
      %524 = vmatpush1.msra.mxu0 0.0
      %525 = vmatprep.subr.mxu0 0.0
      %526 = vmatpush1.msra.mxu0 0.0
      %527 = vmatprep.subr.mxu0 0.0
      %528 = vmatpush1.msra.mxu0 0.0
      %529 = vmatprep.subr.mxu0 0.0
      %530 = vmatpush1.msra.mxu0 0.0
      %531 = vmatprep.subr.mxu0 0.0
      %532 = vmatpush1.msra.mxu0 0.0
      %533 = vmatprep.subr.mxu0 0.0
      %534 = vmatpush1.msra.mxu0 0.0
      %535 = vmatprep.subr.mxu0 0.0
      %536 = vmatpush1.msra.mxu0 0.0
      %537 = vmatprep.subr.mxu0 0.0
      %538 = vmatpush1.msra.mxu0 0.0
      %539 = vmatprep.subr.mxu0 0.0
      %540 = vmatpush1.msra.mxu0 0.0
      %541 = vmatprep.subr.mxu0 0.0
      %542 = vmatpush1.msra.mxu0 0.0
      %543 = vmatprep.subr.mxu0 0.0
      %544 = vmatpush1.msra.mxu0 0.0
      %545 = vmatprep.subr.mxu0 0.0
      %546 = vmatpush1.msra.mxu0 %v513
      %547 = vmatprep.subr.mxu0 0.0
      %548 = vmatpush2.msra.mxu0 0.0
      %549 = vmatprep.subr.mxu0 0.0
      %550 = vmatpush2.msra.mxu0 0.0
      %551 = vmatprep.subr.mxu0 0.0
      %552 = vmatpush2.msra.mxu0 0.0
      %553 = vmatprep.subr.mxu0 0.0
      %554 = vmatpush2.msra.mxu0 0.0
      %555 = vmatprep.subr.mxu0 0.0
      %556 = vmatpush2.msra.mxu0 0.0
      %557 = vmatprep.subr.mxu0 0.0
      %558 = vmatpush2.msra.mxu0 0.0
      %559 = vmatprep.subr.mxu0 0.0
      %560 = vmatpush2.msra.mxu0 0.0
      %561 = vmatprep.subr.mxu0 0.0
      %562 = vmatpush2.msra.mxu0 0.0
      %563 = vmatprep.subr.mxu0 0.0
      %564 = vmatpush2.msra.mxu0 0.0
      %565 = vmatprep.subr.mxu0 0.0
      %566 = vmatpush2.msra.mxu0 0.0
      %567 = vmatprep.subr.mxu0 0.0
      %568 = vmatpush2.msra.mxu0 0.0
      %569 = vmatprep.subr.mxu0 0.0
      %570 = vmatpush2.msra.mxu0 0.0
      %571 = vmatprep.subr.mxu0 0.0
      %572 = vmatpush2.msra.mxu0 0.0
      %573 = vmatprep.subr.mxu0 0.0
      %574 = vmatpush2.msra.mxu0 0.0
      %575 = vmatprep.subr.mxu0 0.0
      %576 = vmatpush2.msra.mxu0 0.0
      %577 = vmatprep.subr.mxu0 0.0
      %578 = vmatpush2.msra.mxu0 0.0
      %579 = vmatprep.mubr.f32.mxu0 0.0
      %580 = vmatmul.mubr.f32.gmra.mxu0 %v416
      %v581 = vpop.f32.mrf.mxu0
      %v582 = vadd.f32 %v412, %v581
      %v583 = vpop.f32.mrf.mxu0
      %584 = vmatprep.mubr.f32.mxu0 0.0
      %585 = vmatmul.mubr.f32.gmra.mxu0 %v419
      %v586 = vpop.f32.mrf.mxu0
      %v587 = vadd.f32 %v412, %v586
      %v588 = vpop.f32.mrf.mxu0
      %589 = vmatprep.mubr.f32.mxu0 0.0
      %590 = vmatmul.mubr.f32.gmra.mxu0 %v422
      %v591 = vpop.f32.mrf.mxu0
      %v592 = vadd.f32 %v412, %v591
      %v593 = vpop.f32.mrf.mxu0
      %594 = vmatprep.mubr.f32.mxu0 0.0
      %595 = vmatmul.mubr.f32.gmra.mxu0 %v425
      %v596 = vpop.f32.mrf.mxu0
      %v597 = vadd.f32 %v412, %v596
      %v598 = vpop.f32.mrf.mxu0
      %599 = vmatprep.mubr.f32.mxu0 0.0
      %600 = vmatmul.mubr.f32.gmra.mxu0 %v428
      %v601 = vpop.f32.mrf.mxu0
      %v602 = vadd.f32 %v412, %v601
      %v603 = vpop.f32.mrf.mxu0
      %604 = vmatprep.mubr.f32.mxu0 0.0
      %605 = vmatmul.mubr.f32.gmra.mxu0 %v431
      %v606 = vpop.f32.mrf.mxu0
      %v607 = vadd.f32 %v412, %v606
      %v608 = vpop.f32.mrf.mxu0
      %609 = vmatprep.mubr.f32.mxu0 0.0
      %610 = vmatmul.mubr.f32.gmra.mxu0 %v434
      %v611 = vpop.f32.mrf.mxu0
      %v612 = vadd.f32 %v412, %v611
      %v613 = vpop.f32.mrf.mxu0
      %614 = vmatprep.mubr.f32.mxu0 0.0
      %615 = vmatmul.mubr.f32.gmra.mxu0 %v437
      %v616 = vpop.f32.mrf.mxu0
      %v617 = vadd.f32 %v412, %v616
      %v618 = vpop.f32.mrf.mxu0
      %619 = vmatprep.mubr.f32.mxu0 0.0
      %620 = vmatmul.mubr.f32.gmra.mxu0 %v440
      %v621 = vpop.f32.mrf.mxu0
      %v622 = vadd.f32 %v412, %v621
      %v623 = vpop.f32.mrf.mxu0
      %624 = vmatprep.mubr.f32.mxu0 0.0
      %625 = vmatmul.mubr.f32.gmra.mxu0 %v443
      %v626 = vpop.f32.mrf.mxu0
      %v627 = vadd.f32 %v412, %v626
      %v628 = vpop.f32.mrf.mxu0
      %629 = vmatprep.mubr.f32.mxu0 0.0
      %630 = vmatmul.mubr.f32.gmra.mxu0 %v446
      %v631 = vpop.f32.mrf.mxu0
      %v632 = vadd.f32 %v412, %v631
      %v633 = vpop.f32.mrf.mxu0
      %634 = vmatprep.mubr.f32.mxu0 0.0
      %635 = vmatmul.mubr.f32.gmra.mxu0 %v449
      %v636 = vpop.f32.mrf.mxu0
      %v637 = vadd.f32 %v412, %v636
      %v638 = vpop.f32.mrf.mxu0
      %639 = vmatprep.mubr.f32.mxu0 0.0
      %640 = vmatmul.mubr.f32.gmra.mxu0 %v452
      %v641 = vpop.f32.mrf.mxu0
      %v642 = vadd.f32 %v412, %v641
      %v643 = vpop.f32.mrf.mxu0
      %644 = vmatprep.mubr.f32.mxu0 0.0
      %645 = vmatmul.mubr.f32.gmra.mxu0 %v455
      %v646 = vpop.f32.mrf.mxu0
      %v647 = vadd.f32 %v412, %v646
      %v648 = vpop.f32.mrf.mxu0
      %649 = vmatprep.mubr.f32.mxu0 0.0
      %650 = vmatmul.mubr.f32.gmra.mxu0 %v458
      %v651 = vpop.f32.mrf.mxu0
      %v652 = vadd.f32 %v412, %v651
      %v653 = vpop.f32.mrf.mxu0
      %654 = vmatprep.mubr.f32.mxu0 0.0
      %655 = vmatmul.mubr.f32.gmra.mxu0 %v461
      %v656 = vpop.f32.mrf.mxu0
      %v657 = vadd.f32 %v412, %v656
      %v658 = vpop.f32.mrf.mxu0
      %659 = vmatprep.mubr.f32.mxu0 0.0
      %660 = vmatmul.mubr.f32.gmra.mxu0 %v464
      %v661 = vpop.f32.mrf.mxu0
      %v662 = vadd.f32 %v412, %v661
      %v663 = vpop.f32.mrf.mxu0
      %664 = vmatprep.mubr.f32.mxu0 0.0
      %665 = vmatmul.mubr.f32.gmra.mxu0 %v467
      %v666 = vpop.f32.mrf.mxu0
      %v667 = vadd.f32 %v412, %v666
      %v668 = vpop.f32.mrf.mxu0
      %669 = vmatprep.mubr.f32.mxu0 0.0
      %670 = vmatmul.mubr.f32.gmra.mxu0 %v470
      %v671 = vpop.f32.mrf.mxu0
      %v672 = vadd.f32 %v412, %v671
      %v673 = vpop.f32.mrf.mxu0
      %674 = vmatprep.mubr.f32.mxu0 0.0
      %675 = vmatmul.mubr.f32.gmra.mxu0 %v473
      %v676 = vpop.f32.mrf.mxu0
      %v677 = vadd.f32 %v412, %v676
      %v678 = vpop.f32.mrf.mxu0
      %679 = vmatprep.mubr.f32.mxu0 0.0
      %680 = vmatmul.mubr.f32.gmra.mxu0 %v476
      %v681 = vpop.f32.mrf.mxu0
      %v682 = vadd.f32 %v412, %v681
      %v683 = vpop.f32.mrf.mxu0
      %684 = vmatprep.mubr.f32.mxu0 0.0
      %685 = vmatmul.mubr.f32.gmra.mxu0 %v479
      %v686 = vpop.f32.mrf.mxu0
      %v687 = vadd.f32 %v412, %v686
      %v688 = vpop.f32.mrf.mxu0
      %689 = vmatprep.mubr.f32.mxu0 0.0
      %690 = vmatmul.mubr.f32.gmra.mxu0 %v482
      %v691 = vpop.f32.mrf.mxu0
      %v692 = vadd.f32 %v412, %v691
      %v693 = vpop.f32.mrf.mxu0
      %694 = vmatprep.mubr.f32.mxu0 0.0
      %695 = vmatmul.mubr.f32.gmra.mxu0 %v485
      %v696 = vpop.f32.mrf.mxu0
      %v697 = vadd.f32 %v412, %v696
      %v698 = vpop.f32.mrf.mxu0
      %699 = vmatprep.mubr.f32.mxu0 0.0
      %700 = vmatmul.mubr.f32.gmra.mxu0 %v488
      %v701 = vpop.f32.mrf.mxu0
      %v702 = vadd.f32 %v412, %v701
      %v703 = vpop.f32.mrf.mxu0
      %704 = vmatprep.mubr.f32.mxu0 0.0
      %705 = vmatmul.mubr.f32.gmra.mxu0 %v491
      %v706 = vpop.f32.mrf.mxu0
      %v707 = vadd.f32 %v412, %v706
      %v708 = vpop.f32.mrf.mxu0
      %709 = vmatprep.mubr.f32.mxu0 0.0
      %710 = vmatmul.mubr.f32.gmra.mxu0 %v494
      %v711 = vpop.f32.mrf.mxu0
      %v712 = vadd.f32 %v412, %v711
      %v713 = vpop.f32.mrf.mxu0
      %714 = vmatprep.mubr.f32.mxu0 0.0
      %715 = vmatmul.mubr.f32.gmra.mxu0 %v497
      %v716 = vpop.f32.mrf.mxu0
      %v717 = vadd.f32 %v412, %v716
      %v718 = vpop.f32.mrf.mxu0
      %719 = vmatprep.mubr.f32.mxu0 0.0
      %720 = vmatmul.mubr.f32.gmra.mxu0 %v500
      %v721 = vpop.f32.mrf.mxu0
      %v722 = vadd.f32 %v412, %v721
      %v723 = vpop.f32.mrf.mxu0
      %724 = vmatprep.mubr.f32.mxu0 0.0
      %725 = vmatmul.mubr.f32.gmra.mxu0 %v503
      %v726 = vpop.f32.mrf.mxu0
      %v727 = vadd.f32 %v412, %v726
      %v728 = vpop.f32.mrf.mxu0
      %729 = vmatprep.mubr.f32.mxu0 0.0
      %730 = vmatmul.mubr.f32.gmra.mxu0 %v506
      %v731 = vpop.f32.mrf.mxu0
      %v732 = vadd.f32 %v412, %v731
      %v733 = vpop.f32.mrf.mxu0
      %734 = vmatprep.mubr.f32.mxu0 0.0
      %735 = vmatmul.mubr.f32.gmra.mxu0 %v509
      %v736 = vpop.f32.mrf.mxu0
      %v737 = vadd.f32 %v412, %v736
      %v738 = vpop.f32.mrf.mxu0
      %739 = vdwg.mxu0
      %740 = vst [vmem:[#allocation2 + $0x8] sm:$0xff] %v582
      %741 = vst [vmem:[#allocation2 + $0x10] sm:$0xff] %v587
      %742 = vst [vmem:[#allocation2 + $0x20] sm:$0xff] %v592
      %743 = vst [vmem:[#allocation2 + $0x28] sm:$0xff] %v597
      %744 = vst [vmem:[#allocation2 + $0x38] sm:$0xff] %v602
      %745 = vst [vmem:[#allocation2 + $0x40] sm:$0xff] %v607
      %746 = vst [vmem:[#allocation2 + $0x50] sm:$0xff] %v612
      %747 = vst [vmem:[#allocation2 + $0x58] sm:$0xff] %v617
      %748 = vst [vmem:[#allocation2 + $0x68] sm:$0xff] %v622
      %749 = vst [vmem:[#allocation2 + $0x70] sm:$0xff] %v627
      %750 = vst [vmem:[#allocation2 + $0x80] sm:$0xff] %v632
      %751 = vst [vmem:[#allocation2 + $0x88] sm:$0xff] %v637
      %752 = vst [vmem:[#allocation2 + $0x98] sm:$0xff] %v642
      %753 = vst [vmem:[#allocation2 + $0xa0] sm:$0xff] %v647
      %754 = vst [vmem:[#allocation2 + $0xb0] sm:$0xff] %v652
      %755 = vst [vmem:[#allocation2 + $0xb8] sm:$0xff] %v657
      %756 = vst [vmem:[#allocation2 + $0xc8] sm:$0xff] %v662
      %757 = vst [vmem:[#allocation2 + $0xd0] sm:$0xff] %v667
      %758 = vst [vmem:[#allocation2 + $0xe0] sm:$0xff] %v672
      %759 = vst [vmem:[#allocation2 + $0xe8] sm:$0xff] %v677
      %760 = vst [vmem:[#allocation2 + $0xf8] sm:$0xff] %v682
      %761 = vst [vmem:[#allocation2 + $0x100] sm:$0xff] %v687
      %762 = vst [vmem:[#allocation2 + $0x110] sm:$0xff] %v692
      %763 = vst [vmem:[#allocation2 + $0x118] sm:$0xff] %v697
      %764 = vst [vmem:[#allocation2 + $0x128] sm:$0xff] %v702
      %765 = vst [vmem:[#allocation2 + $0x130] sm:$0xff] %v707
      %766 = vst [vmem:[#allocation2 + $0x140] sm:$0xff] %v712
      %767 = vst [vmem:[#allocation2 + $0x148] sm:$0xff] %v717
      %768 = vst [vmem:[#allocation2 + $0x158] sm:$0xff] %v722
      %769 = vst [vmem:[#allocation2 + $0x160] sm:$0xff] %v727
      %770 = vst [vmem:[#allocation2 + $0x170] sm:$0xff] %v732
      %771 = vst [vmem:[#allocation2 + $0x178] sm:$0xff] %v737
      %v772 = vld [vmem:[#allocation2 + $0x6] sm:$0xff]
      %v773 = vld [vmem:[#allocation2 + $0xe] sm:$0xff]
      %v774 = vld [vmem:[#allocation2 + $0x1e] sm:$0xff]
      %v775 = vld [vmem:[#allocation2 + $0x26] sm:$0xff]
      %v776 = vld [vmem:[#allocation2 + $0x36] sm:$0xff]
      %v777 = vld [vmem:[#allocation2 + $0x3e] sm:$0xff]
      %v778 = vld [vmem:[#allocation2 + $0x4e] sm:$0xff]
      %v779 = vld [vmem:[#allocation2 + $0x56] sm:$0xff]
      %v780 = vld [vmem:[#allocation2 + $0x66] sm:$0xff]
      %v781 = vld [vmem:[#allocation2 + $0x6e] sm:$0xff]
      %v782 = vld [vmem:[#allocation2 + $0x7e] sm:$0xff]
      %v783 = vld [vmem:[#allocation2 + $0x86] sm:$0xff]
      %v784 = vld [vmem:[#allocation2 + $0x96] sm:$0xff]
      %v785 = vld [vmem:[#allocation2 + $0x9e] sm:$0xff]
      %v786 = vld [vmem:[#allocation2 + $0xae] sm:$0xff]
      %v787 = vld [vmem:[#allocation2 + $0xb6] sm:$0xff]
      %v788 = vld [vmem:[#allocation2 + $0xc6] sm:$0xff]
      %v789 = vld [vmem:[#allocation2 + $0xce] sm:$0xff]
      %v790 = vld [vmem:[#allocation2 + $0xde] sm:$0xff]
      %v791 = vld [vmem:[#allocation2 + $0xe6] sm:$0xff]
      %v792 = vld [vmem:[#allocation2 + $0xf6] sm:$0xff]
      %v793 = vld [vmem:[#allocation2 + $0xfe] sm:$0xff]
      %v794 = vld [vmem:[#allocation2 + $0x10e] sm:$0xff]
      %v795 = vld [vmem:[#allocation2 + $0x116] sm:$0xff]
      %v796 = vld [vmem:[#allocation2 + $0x126] sm:$0xff]
      %v797 = vld [vmem:[#allocation2 + $0x12e] sm:$0xff]
      %v798 = vld [vmem:[#allocation2 + $0x13e] sm:$0xff]
      %v799 = vld [vmem:[#allocation2 + $0x146] sm:$0xff]
      %v800 = vld [vmem:[#allocation2 + $0x156] sm:$0xff]
      %v801 = vld [vmem:[#allocation2 + $0x15e] sm:$0xff]
      %v802 = vld [vmem:[#allocation2 + $0x16e] sm:$0xff]
      %v803 = vld [vmem:[#allocation2 + $0x176] sm:$0xff]
      %v804 = vld [vmem:[#allocation2 + $0x7] sm:$0xff]
      %v805 = vld [vmem:[#allocation2 + $0xf] sm:$0xff]
      %v806 = vld [vmem:[#allocation2 + $0x1f] sm:$0xff]
      %v807 = vld [vmem:[#allocation2 + $0x27] sm:$0xff]
      %v808 = vld [vmem:[#allocation2 + $0x37] sm:$0xff]
      %v809 = vld [vmem:[#allocation2 + $0x3f] sm:$0xff]
      %v810 = vld [vmem:[#allocation2 + $0x4f] sm:$0xff]
      %v811 = vld [vmem:[#allocation2 + $0x57] sm:$0xff]
      %v812 = vld [vmem:[#allocation2 + $0x67] sm:$0xff]
      %v813 = vld [vmem:[#allocation2 + $0x6f] sm:$0xff]
      %v814 = vld [vmem:[#allocation2 + $0x7f] sm:$0xff]
      %v815 = vld [vmem:[#allocation2 + $0x87] sm:$0xff]
      %v816 = vld [vmem:[#allocation2 + $0x97] sm:$0xff]
      %v817 = vld [vmem:[#allocation2 + $0x9f] sm:$0xff]
      %v818 = vld [vmem:[#allocation2 + $0xaf] sm:$0xff]
      %v819 = vld [vmem:[#allocation2 + $0xb7] sm:$0xff]
      %v820 = vld [vmem:[#allocation2 + $0xc7] sm:$0xff]
      %v821 = vld [vmem:[#allocation2 + $0xcf] sm:$0xff]
      %v822 = vld [vmem:[#allocation2 + $0xdf] sm:$0xff]
      %v823 = vld [vmem:[#allocation2 + $0xe7] sm:$0xff]
      %v824 = vld [vmem:[#allocation2 + $0xf7] sm:$0xff]
      %v825 = vld [vmem:[#allocation2 + $0xff] sm:$0xff]
      %v826 = vld [vmem:[#allocation2 + $0x10f] sm:$0xff]
      %v827 = vld [vmem:[#allocation2 + $0x117] sm:$0xff]
      %v828 = vld [vmem:[#allocation2 + $0x127] sm:$0xff]
      %v829 = vld [vmem:[#allocation2 + $0x12f] sm:$0xff]
      %v830 = vld [vmem:[#allocation2 + $0x13f] sm:$0xff]
      %v831 = vld [vmem:[#allocation2 + $0x147] sm:$0xff]
      %v832 = vld [vmem:[#allocation2 + $0x157] sm:$0xff]
      %v833 = vld [vmem:[#allocation2 + $0x15f] sm:$0xff]
      %v834 = vld [vmem:[#allocation2 + $0x16f] sm:$0xff]
      %v835 = vld [vmem:[#allocation2 + $0x177] sm:$0xff]
      %v836 = vld [vmem:[#allocation2 + $0x8] sm:$0xff]
      %v837 = vld [vmem:[#allocation2 + $0x10] sm:$0xff]
      %v838 = vld [vmem:[#allocation2 + $0x20] sm:$0xff]
      %v839 = vld [vmem:[#allocation2 + $0x28] sm:$0xff]
      %v840 = vld [vmem:[#allocation2 + $0x38] sm:$0xff]
      %v841 = vld [vmem:[#allocation2 + $0x40] sm:$0xff]
      %v842 = vld [vmem:[#allocation2 + $0x50] sm:$0xff]
      %v843 = vld [vmem:[#allocation2 + $0x58] sm:$0xff]
      %v844 = vld [vmem:[#allocation2 + $0x68] sm:$0xff]
      %v845 = vld [vmem:[#allocation2 + $0x70] sm:$0xff]
      %v846 = vld [vmem:[#allocation2 + $0x80] sm:$0xff]
      %v847 = vld [vmem:[#allocation2 + $0x88] sm:$0xff]
      %v848 = vld [vmem:[#allocation2 + $0x98] sm:$0xff]
      %v849 = vld [vmem:[#allocation2 + $0xa0] sm:$0xff]
      %v850 = vld [vmem:[#allocation2 + $0xb0] sm:$0xff]
      %v851 = vld [vmem:[#allocation2 + $0xb8] sm:$0xff]
      %v852 = vld [vmem:[#allocation2 + $0xc8] sm:$0xff]
      %v853 = vld [vmem:[#allocation2 + $0xd0] sm:$0xff]
      %v854 = vld [vmem:[#allocation2 + $0xe0] sm:$0xff]
      %v855 = vld [vmem:[#allocation2 + $0xe8] sm:$0xff]
      %v856 = vld [vmem:[#allocation2 + $0xf8] sm:$0xff]
      %v857 = vld [vmem:[#allocation2 + $0x100] sm:$0xff]
      %v858 = vld [vmem:[#allocation2 + $0x110] sm:$0xff]
      %v859 = vld [vmem:[#allocation2 + $0x118] sm:$0xff]
      %v860 = vld [vmem:[#allocation2 + $0x128] sm:$0xff]
      %v861 = vld [vmem:[#allocation2 + $0x130] sm:$0xff]
      %v862 = vld [vmem:[#allocation2 + $0x140] sm:$0xff]
      %v863 = vld [vmem:[#allocation2 + $0x148] sm:$0xff]
      %v864 = vld [vmem:[#allocation2 + $0x158] sm:$0xff]
      %v865 = vld [vmem:[#allocation2 + $0x160] sm:$0xff]
      %v866 = vld [vmem:[#allocation2 + $0x170] sm:$0xff]
      %v867 = vld [vmem:[#allocation2 + $0x178] sm:$0xff]
      %v868 = vld [vmem:[%s4] sm:$0xff]
      %v869 = vld [vmem:[%s4 + $0x8] sm:$0xff]
      %v870 = vld [vmem:[%s4 + $0x10] sm:$0xff]
      %v871 = vld [vmem:[%s4 + $0x18] sm:$0xff]
      %v872 = vld [vmem:[%s4 + $0x20] sm:$0xff]
      %v873 = vld [vmem:[%s4 + $0x28] sm:$0xff]
      %v874 = vld [vmem:[%s4 + $0x30] sm:$0xff]
      %v875 = vld [vmem:[%s4 + $0x38] sm:$0xff]
      %v876 = vld [vmem:[%s4 + $0x40] sm:$0xff]
      %v877 = vld [vmem:[%s4 + $0x48] sm:$0xff]
      %v878 = vld [vmem:[%s4 + $0x50] sm:$0xff]
      %v879 = vld [vmem:[%s4 + $0x58] sm:$0xff]
      %v880 = vld [vmem:[%s4 + $0x60] sm:$0xff]
      %v881 = vld [vmem:[%s4 + $0x68] sm:$0xff]
      %v882 = vld [vmem:[%s4 + $0x70] sm:$0xff]
      %v883 = vld [vmem:[%s4 + $0x78] sm:$0xff]
      %v884 = vld [vmem:[%s4 + $0x80] sm:$0xff]
      %v885 = vld [vmem:[%s4 + $0x88] sm:$0xff]
      %v886 = vld [vmem:[%s4 + $0x90] sm:$0xff]
      %v887 = vld [vmem:[%s4 + $0x98] sm:$0xff]
      %v888 = vld [vmem:[%s4 + $0xa0] sm:$0xff]
      %v889 = vld [vmem:[%s4 + $0xa8] sm:$0xff]
      %v890 = vld [vmem:[%s4 + $0xb0] sm:$0xff]
      %v891 = vld [vmem:[%s4 + $0xb8] sm:$0xff]
      %v892 = vld [vmem:[%s4 + $0xc0] sm:$0xff]
      %v893 = vld [vmem:[%s4 + $0xc8] sm:$0xff]
      %v894 = vld [vmem:[%s4 + $0xd0] sm:$0xff]
      %v895 = vld [vmem:[%s4 + $0xd8] sm:$0xff]
      %v896 = vld [vmem:[%s4 + $0xe0] sm:$0xff]
      %v897 = vld [vmem:[%s4 + $0xe8] sm:$0xff]
      %v898 = vld [vmem:[%s4 + $0xf0] sm:$0xff]
      %v899 = vld [vmem:[%s4 + $0xf8] sm:$0xff]
      %v900 = vld [vmem:[%s4 + $0x100] sm:$0xff]
      %v901 = vld [vmem:[%s4 + $0x108] sm:$0xff]
      %v902 = vld [vmem:[%s4 + $0x110] sm:$0xff]
      %v903 = vld [vmem:[%s4 + $0x118] sm:$0xff]
      %v904 = vld [vmem:[%s4 + $0x120] sm:$0xff]
      %v905 = vld [vmem:[%s4 + $0x128] sm:$0xff]
      %v906 = vld [vmem:[%s4 + $0x130] sm:$0xff]
      %v907 = vld [vmem:[%s4 + $0x138] sm:$0xff]
      %v908 = vld [vmem:[%s4 + $0x140] sm:$0xff]
      %v909 = vld [vmem:[%s4 + $0x148] sm:$0xff]
      %v910 = vld [vmem:[%s4 + $0x150] sm:$0xff]
      %v911 = vld [vmem:[%s4 + $0x158] sm:$0xff]
      %v912 = vld [vmem:[%s4 + $0x160] sm:$0xff]
      %v913 = vld [vmem:[%s4 + $0x168] sm:$0xff]
      %v914 = vld [vmem:[%s4 + $0x170] sm:$0xff]
      %v915 = vld [vmem:[%s4 + $0x178] sm:$0xff]
      %v916 = vld [vmem:[%s5] sm:$0x1]
      %v918 = vlaneseq
      %v919 = vshrl.u32 %v918, 7
      %v920 = vsub.s32 0, %v919
      %v921 = vrot.slane %v916, %v920
      %923 = vmatprep.subr.mxu0 0.0
      %924 = vmatpush1.msra.mxu0 %v883
      %925 = vmatprep.subr.mxu0 0.0
      %926 = vmatpush1.msra.mxu0 %v882
      %927 = vmatprep.subr.mxu0 0.0
      %928 = vmatpush1.msra.mxu0 %v881
      %929 = vmatprep.subr.mxu0 0.0
      %930 = vmatpush1.msra.mxu0 %v880
      %931 = vmatprep.subr.mxu0 0.0
      %932 = vmatpush1.msra.mxu0 %v879
      %933 = vmatprep.subr.mxu0 0.0
      %934 = vmatpush1.msra.mxu0 %v878
      %935 = vmatprep.subr.mxu0 0.0
      %936 = vmatpush1.msra.mxu0 %v877
      %937 = vmatprep.subr.mxu0 0.0
      %938 = vmatpush1.msra.mxu0 %v876
      %939 = vmatprep.subr.mxu0 0.0
      %940 = vmatpush1.msra.mxu0 %v875
      %941 = vmatprep.subr.mxu0 0.0
      %942 = vmatpush1.msra.mxu0 %v874
      %943 = vmatprep.subr.mxu0 0.0
      %944 = vmatpush1.msra.mxu0 %v873
      %945 = vmatprep.subr.mxu0 0.0
      %946 = vmatpush1.msra.mxu0 %v872
      %947 = vmatprep.subr.mxu0 0.0
      %948 = vmatpush1.msra.mxu0 %v871
      %949 = vmatprep.subr.mxu0 0.0
      %950 = vmatpush1.msra.mxu0 %v870
      %951 = vmatprep.subr.mxu0 0.0
      %952 = vmatpush1.msra.mxu0 %v869
      %953 = vmatprep.subr.mxu0 0.0
      %954 = vmatpush1.msra.mxu0 %v868
      %955 = vmatprep.subr.mxu0 0.0
      %956 = vmatpush2.msra.mxu0 %v899
      %957 = vmatprep.subr.mxu0 0.0
      %958 = vmatpush2.msra.mxu0 %v898
      %959 = vmatprep.subr.mxu0 0.0
      %960 = vmatpush2.msra.mxu0 %v897
      %961 = vmatprep.subr.mxu0 0.0
      %962 = vmatpush2.msra.mxu0 %v896
      %963 = vmatprep.subr.mxu0 0.0
      %964 = vmatpush2.msra.mxu0 %v895
      %965 = vmatprep.subr.mxu0 0.0
      %966 = vmatpush2.msra.mxu0 %v894
      %967 = vmatprep.subr.mxu0 0.0
      %968 = vmatpush2.msra.mxu0 %v893
      %969 = vmatprep.subr.mxu0 0.0
      %970 = vmatpush2.msra.mxu0 %v892
      %971 = vmatprep.subr.mxu0 0.0
      %972 = vmatpush2.msra.mxu0 %v891
      %973 = vmatprep.subr.mxu0 0.0
      %974 = vmatpush2.msra.mxu0 %v890
      %975 = vmatprep.subr.mxu0 0.0
      %976 = vmatpush2.msra.mxu0 %v889
      %977 = vmatprep.subr.mxu0 0.0
      %978 = vmatpush2.msra.mxu0 %v888
      %979 = vmatprep.subr.mxu0 0.0
      %980 = vmatpush2.msra.mxu0 %v887
      %981 = vmatprep.subr.mxu0 0.0
      %982 = vmatpush2.msra.mxu0 %v886
      %983 = vmatprep.subr.mxu0 0.0
      %984 = vmatpush2.msra.mxu0 %v885
      %985 = vmatprep.subr.mxu0 0.0
      %986 = vmatpush2.msra.mxu0 %v884
      %987 = vmatprep.mubr.f32.mxu0 %v804
      %988 = vmatmul.mubr.f32.gmra.mxu0 %v772
      %v989 = vpop.f32.mrf.mxu0
      %v990 = vadd.f32 %v921, %v989
      %v991 = vpop.f32.mrf.mxu0
      %992 = vmatprep.mubr.f32.mxu0 %v805
      %993 = vmatmul.mubr.f32.gmra.mxu0 %v773
      %v994 = vpop.f32.mrf.mxu0
      %v995 = vadd.f32 %v921, %v994
      %v996 = vpop.f32.mrf.mxu0
      %997 = vmatprep.mubr.f32.mxu0 %v806
      %998 = vmatmul.mubr.f32.gmra.mxu0 %v774
      %v999 = vpop.f32.mrf.mxu0
      %v1000 = vadd.f32 %v921, %v999
      %v1001 = vpop.f32.mrf.mxu0
      %1002 = vmatprep.mubr.f32.mxu0 %v807
      %1003 = vmatmul.mubr.f32.gmra.mxu0 %v775
      %v1004 = vpop.f32.mrf.mxu0
      %v1005 = vadd.f32 %v921, %v1004
      %v1006 = vpop.f32.mrf.mxu0
      %1007 = vmatprep.mubr.f32.mxu0 %v808
      %1008 = vmatmul.mubr.f32.gmra.mxu0 %v776
      %v1009 = vpop.f32.mrf.mxu0
      %v1010 = vadd.f32 %v921, %v1009
      %v1011 = vpop.f32.mrf.mxu0
      %1012 = vmatprep.mubr.f32.mxu0 %v809
      %1013 = vmatmul.mubr.f32.gmra.mxu0 %v777
      %v1014 = vpop.f32.mrf.mxu0
      %v1015 = vadd.f32 %v921, %v1014
      %v1016 = vpop.f32.mrf.mxu0
      %1017 = vmatprep.mubr.f32.mxu0 %v810
      %1018 = vmatmul.mubr.f32.gmra.mxu0 %v778
      %v1019 = vpop.f32.mrf.mxu0
      %v1020 = vadd.f32 %v921, %v1019
      %v1021 = vpop.f32.mrf.mxu0
      %1022 = vmatprep.mubr.f32.mxu0 %v811
      %1023 = vmatmul.mubr.f32.gmra.mxu0 %v779
      %v1024 = vpop.f32.mrf.mxu0
      %v1025 = vadd.f32 %v921, %v1024
      %v1026 = vpop.f32.mrf.mxu0
      %1027 = vmatprep.mubr.f32.mxu0 %v812
      %1028 = vmatmul.mubr.f32.gmra.mxu0 %v780
      %v1029 = vpop.f32.mrf.mxu0
      %v1030 = vadd.f32 %v921, %v1029
      %v1031 = vpop.f32.mrf.mxu0
      %1032 = vmatprep.mubr.f32.mxu0 %v813
      %1033 = vmatmul.mubr.f32.gmra.mxu0 %v781
      %v1034 = vpop.f32.mrf.mxu0
      %v1035 = vadd.f32 %v921, %v1034
      %v1036 = vpop.f32.mrf.mxu0
      %1037 = vmatprep.mubr.f32.mxu0 %v814
      %1038 = vmatmul.mubr.f32.gmra.mxu0 %v782
      %v1039 = vpop.f32.mrf.mxu0
      %v1040 = vadd.f32 %v921, %v1039
      %v1041 = vpop.f32.mrf.mxu0
      %1042 = vmatprep.mubr.f32.mxu0 %v815
      %1043 = vmatmul.mubr.f32.gmra.mxu0 %v783
      %v1044 = vpop.f32.mrf.mxu0
      %v1045 = vadd.f32 %v921, %v1044
      %v1046 = vpop.f32.mrf.mxu0
      %1047 = vmatprep.mubr.f32.mxu0 %v816
      %1048 = vmatmul.mubr.f32.gmra.mxu0 %v784
      %v1049 = vpop.f32.mrf.mxu0
      %v1050 = vadd.f32 %v921, %v1049
      %v1051 = vpop.f32.mrf.mxu0
      %1052 = vmatprep.mubr.f32.mxu0 %v817
      %1053 = vmatmul.mubr.f32.gmra.mxu0 %v785
      %v1054 = vpop.f32.mrf.mxu0
      %v1055 = vadd.f32 %v921, %v1054
      %v1056 = vpop.f32.mrf.mxu0
      %1057 = vmatprep.mubr.f32.mxu0 %v818
      %1058 = vmatmul.mubr.f32.gmra.mxu0 %v786
      %v1059 = vpop.f32.mrf.mxu0
      %v1060 = vadd.f32 %v921, %v1059
      %v1061 = vpop.f32.mrf.mxu0
      %1062 = vmatprep.mubr.f32.mxu0 %v819
      %1063 = vmatmul.mubr.f32.gmra.mxu0 %v787
      %v1064 = vpop.f32.mrf.mxu0
      %v1065 = vadd.f32 %v921, %v1064
      %v1066 = vpop.f32.mrf.mxu0
      %1067 = vmatprep.mubr.f32.mxu0 %v820
      %1068 = vmatmul.mubr.f32.gmra.mxu0 %v788
      %v1069 = vpop.f32.mrf.mxu0
      %v1070 = vadd.f32 %v921, %v1069
      %v1071 = vpop.f32.mrf.mxu0
      %1072 = vmatprep.mubr.f32.mxu0 %v821
      %1073 = vmatmul.mubr.f32.gmra.mxu0 %v789
      %v1074 = vpop.f32.mrf.mxu0
      %v1075 = vadd.f32 %v921, %v1074
      %v1076 = vpop.f32.mrf.mxu0
      %1077 = vmatprep.mubr.f32.mxu0 %v822
      %1078 = vmatmul.mubr.f32.gmra.mxu0 %v790
      %v1079 = vpop.f32.mrf.mxu0
      %v1080 = vadd.f32 %v921, %v1079
      %v1081 = vpop.f32.mrf.mxu0
      %1082 = vmatprep.mubr.f32.mxu0 %v823
      %1083 = vmatmul.mubr.f32.gmra.mxu0 %v791
      %v1084 = vpop.f32.mrf.mxu0
      %v1085 = vadd.f32 %v921, %v1084
      %v1086 = vpop.f32.mrf.mxu0
      %1087 = vmatprep.mubr.f32.mxu0 %v824
      %1088 = vmatmul.mubr.f32.gmra.mxu0 %v792
      %v1089 = vpop.f32.mrf.mxu0
      %v1090 = vadd.f32 %v921, %v1089
      %v1091 = vpop.f32.mrf.mxu0
      %1092 = vmatprep.mubr.f32.mxu0 %v825
      %1093 = vmatmul.mubr.f32.gmra.mxu0 %v793
      %v1094 = vpop.f32.mrf.mxu0
      %v1095 = vadd.f32 %v921, %v1094
      %v1096 = vpop.f32.mrf.mxu0
      %1097 = vmatprep.mubr.f32.mxu0 %v826
      %1098 = vmatmul.mubr.f32.gmra.mxu0 %v794
      %v1099 = vpop.f32.mrf.mxu0
      %v1100 = vadd.f32 %v921, %v1099
      %v1101 = vpop.f32.mrf.mxu0
      %1102 = vmatprep.mubr.f32.mxu0 %v827
      %1103 = vmatmul.mubr.f32.gmra.mxu0 %v795
      %v1104 = vpop.f32.mrf.mxu0
      %v1105 = vadd.f32 %v921, %v1104
      %v1106 = vpop.f32.mrf.mxu0
      %1107 = vmatprep.mubr.f32.mxu0 %v828
      %1108 = vmatmul.mubr.f32.gmra.mxu0 %v796
      %v1109 = vpop.f32.mrf.mxu0
      %v1110 = vadd.f32 %v921, %v1109
      %v1111 = vpop.f32.mrf.mxu0
      %1112 = vmatprep.mubr.f32.mxu0 %v829
      %1113 = vmatmul.mubr.f32.gmra.mxu0 %v797
      %v1114 = vpop.f32.mrf.mxu0
      %v1115 = vadd.f32 %v921, %v1114
      %v1116 = vpop.f32.mrf.mxu0
      %1117 = vmatprep.mubr.f32.mxu0 %v830
      %1118 = vmatmul.mubr.f32.gmra.mxu0 %v798
      %v1119 = vpop.f32.mrf.mxu0
      %v1120 = vadd.f32 %v921, %v1119
      %v1121 = vpop.f32.mrf.mxu0
      %1122 = vmatprep.mubr.f32.mxu0 %v831
      %1123 = vmatmul.mubr.f32.gmra.mxu0 %v799
      %v1124 = vpop.f32.mrf.mxu0
      %v1125 = vadd.f32 %v921, %v1124
      %v1126 = vpop.f32.mrf.mxu0
      %1127 = vmatprep.mubr.f32.mxu0 %v832
      %1128 = vmatmul.mubr.f32.gmra.mxu0 %v800
      %v1129 = vpop.f32.mrf.mxu0
      %v1130 = vadd.f32 %v921, %v1129
      %v1131 = vpop.f32.mrf.mxu0
      %1132 = vmatprep.mubr.f32.mxu0 %v833
      %1133 = vmatmul.mubr.f32.gmra.mxu0 %v801
      %v1134 = vpop.f32.mrf.mxu0
      %v1135 = vadd.f32 %v921, %v1134
      %v1136 = vpop.f32.mrf.mxu0
      %1137 = vmatprep.mubr.f32.mxu0 %v834
      %1138 = vmatmul.mubr.f32.gmra.mxu0 %v802
      %v1139 = vpop.f32.mrf.mxu0
      %v1140 = vadd.f32 %v921, %v1139
      %v1141 = vpop.f32.mrf.mxu0
      %1142 = vmatprep.mubr.f32.mxu0 %v835
      %1143 = vmatmul.mubr.f32.gmra.mxu0 %v803
      %v1144 = vpop.f32.mrf.mxu0
      %v1145 = vadd.f32 %v921, %v1144
      %v1146 = vpop.f32.mrf.mxu0
      %1147 = vdwg.mxu0
      %1148 = vmatprep.subr.mxu0 0.0
      %1149 = vmatpush1.msra.mxu0 %v915
      %1150 = vmatprep.subr.mxu0 0.0
      %1151 = vmatpush1.msra.mxu0 %v914
      %1152 = vmatprep.subr.mxu0 0.0
      %1153 = vmatpush1.msra.mxu0 %v913
      %1154 = vmatprep.subr.mxu0 0.0
      %1155 = vmatpush1.msra.mxu0 %v912
      %1156 = vmatprep.subr.mxu0 0.0
      %1157 = vmatpush1.msra.mxu0 %v911
      %1158 = vmatprep.subr.mxu0 0.0
      %1159 = vmatpush1.msra.mxu0 %v910
      %1160 = vmatprep.subr.mxu0 0.0
      %1161 = vmatpush1.msra.mxu0 %v909
      %1162 = vmatprep.subr.mxu0 0.0
      %1163 = vmatpush1.msra.mxu0 %v908
      %1164 = vmatprep.subr.mxu0 0.0
      %1165 = vmatpush1.msra.mxu0 %v907
      %1166 = vmatprep.subr.mxu0 0.0
      %1167 = vmatpush1.msra.mxu0 %v906
      %1168 = vmatprep.subr.mxu0 0.0
      %1169 = vmatpush1.msra.mxu0 %v905
      %1170 = vmatprep.subr.mxu0 0.0
      %1171 = vmatpush1.msra.mxu0 %v904
      %1172 = vmatprep.subr.mxu0 0.0
      %1173 = vmatpush1.msra.mxu0 %v903
      %1174 = vmatprep.subr.mxu0 0.0
      %1175 = vmatpush1.msra.mxu0 %v902
      %1176 = vmatprep.subr.mxu0 0.0
      %1177 = vmatpush1.msra.mxu0 %v901
      %1178 = vmatprep.subr.mxu0 0.0
      %1179 = vmatpush1.msra.mxu0 %v900
      %1180 = vmatprep.subr.mxu0 0.0
      %1181 = vmatpush2.msra.mxu0 0.0
      %1182 = vmatprep.subr.mxu0 0.0
      %1183 = vmatpush2.msra.mxu0 0.0
      %1184 = vmatprep.subr.mxu0 0.0
      %1185 = vmatpush2.msra.mxu0 0.0
      %1186 = vmatprep.subr.mxu0 0.0
      %1187 = vmatpush2.msra.mxu0 0.0
      %1188 = vmatprep.subr.mxu0 0.0
      %1189 = vmatpush2.msra.mxu0 0.0
      %1190 = vmatprep.subr.mxu0 0.0
      %1191 = vmatpush2.msra.mxu0 0.0
      %1192 = vmatprep.subr.mxu0 0.0
      %1193 = vmatpush2.msra.mxu0 0.0
      %1194 = vmatprep.subr.mxu0 0.0
      %1195 = vmatpush2.msra.mxu0 0.0
      %1196 = vmatprep.subr.mxu0 0.0
      %1197 = vmatpush2.msra.mxu0 0.0
      %1198 = vmatprep.subr.mxu0 0.0
      %1199 = vmatpush2.msra.mxu0 0.0
      %1200 = vmatprep.subr.mxu0 0.0
      %1201 = vmatpush2.msra.mxu0 0.0
      %1202 = vmatprep.subr.mxu0 0.0
      %1203 = vmatpush2.msra.mxu0 0.0
      %1204 = vmatprep.subr.mxu0 0.0
      %1205 = vmatpush2.msra.mxu0 0.0
      %1206 = vmatprep.subr.mxu0 0.0
      %1207 = vmatpush2.msra.mxu0 0.0
      %1208 = vmatprep.subr.mxu0 0.0
      %1209 = vmatpush2.msra.mxu0 0.0
      %1210 = vmatprep.subr.mxu0 0.0
      %1211 = vmatpush2.msra.mxu0 0.0
      %1212 = vmatprep.mubr.f32.mxu0 0.0
      %1213 = vmatmul.mubr.f32.gmra.mxu0 %v836
      %v1214 = vpop.f32.mrf.mxu0
      %v1215 = vadd.f32 %v990, %v1214
      %v1216 = vpop.f32.mrf.mxu0
      %1217 = vmatprep.mubr.f32.mxu0 0.0
      %1218 = vmatmul.mubr.f32.gmra.mxu0 %v837
      %v1219 = vpop.f32.mrf.mxu0
      %v1220 = vadd.f32 %v995, %v1219
      %v1221 = vpop.f32.mrf.mxu0
      %1222 = vmatprep.mubr.f32.mxu0 0.0
      %1223 = vmatmul.mubr.f32.gmra.mxu0 %v838
      %v1224 = vpop.f32.mrf.mxu0
      %v1225 = vadd.f32 %v1000, %v1224
      %v1226 = vpop.f32.mrf.mxu0
      %1227 = vmatprep.mubr.f32.mxu0 0.0
      %1228 = vmatmul.mubr.f32.gmra.mxu0 %v839
      %v1229 = vpop.f32.mrf.mxu0
      %v1230 = vadd.f32 %v1005, %v1229
      %v1231 = vpop.f32.mrf.mxu0
      %1232 = vmatprep.mubr.f32.mxu0 0.0
      %1233 = vmatmul.mubr.f32.gmra.mxu0 %v840
      %v1234 = vpop.f32.mrf.mxu0
      %v1235 = vadd.f32 %v1010, %v1234
      %v1236 = vpop.f32.mrf.mxu0
      %1237 = vmatprep.mubr.f32.mxu0 0.0
      %1238 = vmatmul.mubr.f32.gmra.mxu0 %v841
      %v1239 = vpop.f32.mrf.mxu0
      %v1240 = vadd.f32 %v1015, %v1239
      %v1241 = vpop.f32.mrf.mxu0
      %1242 = vmatprep.mubr.f32.mxu0 0.0
      %1243 = vmatmul.mubr.f32.gmra.mxu0 %v842
      %v1244 = vpop.f32.mrf.mxu0
      %v1245 = vadd.f32 %v1020, %v1244
      %v1246 = vpop.f32.mrf.mxu0
      %1247 = vmatprep.mubr.f32.mxu0 0.0
      %1248 = vmatmul.mubr.f32.gmra.mxu0 %v843
      %v1249 = vpop.f32.mrf.mxu0
      %v1250 = vadd.f32 %v1025, %v1249
      %v1251 = vpop.f32.mrf.mxu0
      %1252 = vmatprep.mubr.f32.mxu0 0.0
      %1253 = vmatmul.mubr.f32.gmra.mxu0 %v844
      %v1254 = vpop.f32.mrf.mxu0
      %v1255 = vadd.f32 %v1030, %v1254
      %v1256 = vpop.f32.mrf.mxu0
      %1257 = vmatprep.mubr.f32.mxu0 0.0
      %1258 = vmatmul.mubr.f32.gmra.mxu0 %v845
      %v1259 = vpop.f32.mrf.mxu0
      %v1260 = vadd.f32 %v1035, %v1259
      %v1261 = vpop.f32.mrf.mxu0
      %1262 = vmatprep.mubr.f32.mxu0 0.0
      %1263 = vmatmul.mubr.f32.gmra.mxu0 %v846
      %v1264 = vpop.f32.mrf.mxu0
      %v1265 = vadd.f32 %v1040, %v1264
      %v1266 = vpop.f32.mrf.mxu0
      %1267 = vmatprep.mubr.f32.mxu0 0.0
      %1268 = vmatmul.mubr.f32.gmra.mxu0 %v847
      %v1269 = vpop.f32.mrf.mxu0
      %v1270 = vadd.f32 %v1045, %v1269
      %v1271 = vpop.f32.mrf.mxu0
      %1272 = vmatprep.mubr.f32.mxu0 0.0
      %1273 = vmatmul.mubr.f32.gmra.mxu0 %v848
      %v1274 = vpop.f32.mrf.mxu0
      %v1275 = vadd.f32 %v1050, %v1274
      %v1276 = vpop.f32.mrf.mxu0
      %1277 = vmatprep.mubr.f32.mxu0 0.0
      %1278 = vmatmul.mubr.f32.gmra.mxu0 %v849
      %v1279 = vpop.f32.mrf.mxu0
      %v1280 = vadd.f32 %v1055, %v1279
      %v1281 = vpop.f32.mrf.mxu0
      %1282 = vmatprep.mubr.f32.mxu0 0.0
      %1283 = vmatmul.mubr.f32.gmra.mxu0 %v850
      %v1284 = vpop.f32.mrf.mxu0
      %v1285 = vadd.f32 %v1060, %v1284
      %v1286 = vpop.f32.mrf.mxu0
      %1287 = vmatprep.mubr.f32.mxu0 0.0
      %1288 = vmatmul.mubr.f32.gmra.mxu0 %v851
      %v1289 = vpop.f32.mrf.mxu0
      %v1290 = vadd.f32 %v1065, %v1289
      %v1291 = vpop.f32.mrf.mxu0
      %1292 = vmatprep.mubr.f32.mxu0 0.0
      %1293 = vmatmul.mubr.f32.gmra.mxu0 %v852
      %v1294 = vpop.f32.mrf.mxu0
      %v1295 = vadd.f32 %v1070, %v1294
      %v1296 = vpop.f32.mrf.mxu0
      %1297 = vmatprep.mubr.f32.mxu0 0.0
      %1298 = vmatmul.mubr.f32.gmra.mxu0 %v853
      %v1299 = vpop.f32.mrf.mxu0
      %v1300 = vadd.f32 %v1075, %v1299
      %v1301 = vpop.f32.mrf.mxu0
      %1302 = vmatprep.mubr.f32.mxu0 0.0
      %1303 = vmatmul.mubr.f32.gmra.mxu0 %v854
      %v1304 = vpop.f32.mrf.mxu0
      %v1305 = vadd.f32 %v1080, %v1304
      %v1306 = vpop.f32.mrf.mxu0
      %1307 = vmatprep.mubr.f32.mxu0 0.0
      %1308 = vmatmul.mubr.f32.gmra.mxu0 %v855
      %v1309 = vpop.f32.mrf.mxu0
      %v1310 = vadd.f32 %v1085, %v1309
      %v1311 = vpop.f32.mrf.mxu0
      %1312 = vmatprep.mubr.f32.mxu0 0.0
      %1313 = vmatmul.mubr.f32.gmra.mxu0 %v856
      %v1314 = vpop.f32.mrf.mxu0
      %v1315 = vadd.f32 %v1090, %v1314
      %v1316 = vpop.f32.mrf.mxu0
      %1317 = vmatprep.mubr.f32.mxu0 0.0
      %1318 = vmatmul.mubr.f32.gmra.mxu0 %v857
      %v1319 = vpop.f32.mrf.mxu0
      %v1320 = vadd.f32 %v1095, %v1319
      %v1321 = vpop.f32.mrf.mxu0
      %1322 = vmatprep.mubr.f32.mxu0 0.0
      %1323 = vmatmul.mubr.f32.gmra.mxu0 %v858
      %v1324 = vpop.f32.mrf.mxu0
      %v1325 = vadd.f32 %v1100, %v1324
      %v1326 = vpop.f32.mrf.mxu0
      %1327 = vmatprep.mubr.f32.mxu0 0.0
      %1328 = vmatmul.mubr.f32.gmra.mxu0 %v859
      %v1329 = vpop.f32.mrf.mxu0
      %v1330 = vadd.f32 %v1105, %v1329
      %v1331 = vpop.f32.mrf.mxu0
      %1332 = vmatprep.mubr.f32.mxu0 0.0
      %1333 = vmatmul.mubr.f32.gmra.mxu0 %v860
      %v1334 = vpop.f32.mrf.mxu0
      %v1335 = vadd.f32 %v1110, %v1334
      %v1336 = vpop.f32.mrf.mxu0
      %1337 = vmatprep.mubr.f32.mxu0 0.0
      %1338 = vmatmul.mubr.f32.gmra.mxu0 %v861
      %v1339 = vpop.f32.mrf.mxu0
      %v1340 = vadd.f32 %v1115, %v1339
      %v1341 = vpop.f32.mrf.mxu0
      %1342 = vmatprep.mubr.f32.mxu0 0.0
      %1343 = vmatmul.mubr.f32.gmra.mxu0 %v862
      %v1344 = vpop.f32.mrf.mxu0
      %v1345 = vadd.f32 %v1120, %v1344
      %v1346 = vpop.f32.mrf.mxu0
      %1347 = vmatprep.mubr.f32.mxu0 0.0
      %1348 = vmatmul.mubr.f32.gmra.mxu0 %v863
      %v1349 = vpop.f32.mrf.mxu0
      %v1350 = vadd.f32 %v1125, %v1349
      %v1351 = vpop.f32.mrf.mxu0
      %1352 = vmatprep.mubr.f32.mxu0 0.0
      %1353 = vmatmul.mubr.f32.gmra.mxu0 %v864
      %v1354 = vpop.f32.mrf.mxu0
      %v1355 = vadd.f32 %v1130, %v1354
      %v1356 = vpop.f32.mrf.mxu0
      %1357 = vmatprep.mubr.f32.mxu0 0.0
      %1358 = vmatmul.mubr.f32.gmra.mxu0 %v865
      %v1359 = vpop.f32.mrf.mxu0
      %v1360 = vadd.f32 %v1135, %v1359
      %v1361 = vpop.f32.mrf.mxu0
      %1362 = vmatprep.mubr.f32.mxu0 0.0
      %1363 = vmatmul.mubr.f32.gmra.mxu0 %v866
      %v1364 = vpop.f32.mrf.mxu0
      %v1365 = vadd.f32 %v1140, %v1364
      %v1366 = vpop.f32.mrf.mxu0
      %1367 = vmatprep.mubr.f32.mxu0 0.0
      %1368 = vmatmul.mubr.f32.gmra.mxu0 %v867
      %v1369 = vpop.f32.mrf.mxu0
      %v1370 = vadd.f32 %v1145, %v1369
      %v1371 = vpop.f32.mrf.mxu0
      %1372 = vdwg.mxu0
      %v1373 = vmax.f32 %v1215, 0.0
      %v1374 = vmax.f32 %v1220, 0.0
      %v1375 = vmax.f32 %v1225, 0.0
      %v1376 = vmax.f32 %v1230, 0.0
      %v1377 = vmax.f32 %v1235, 0.0
      %v1378 = vmax.f32 %v1240, 0.0
      %v1379 = vmax.f32 %v1245, 0.0
      %v1380 = vmax.f32 %v1250, 0.0
      %v1381 = vmax.f32 %v1255, 0.0
      %v1382 = vmax.f32 %v1260, 0.0
      %v1383 = vmax.f32 %v1265, 0.0
      %v1384 = vmax.f32 %v1270, 0.0
      %v1385 = vmax.f32 %v1275, 0.0
      %v1386 = vmax.f32 %v1280, 0.0
      %v1387 = vmax.f32 %v1285, 0.0
      %v1388 = vmax.f32 %v1290, 0.0
      %v1389 = vmax.f32 %v1295, 0.0
      %v1390 = vmax.f32 %v1300, 0.0
      %v1391 = vmax.f32 %v1305, 0.0
      %v1392 = vmax.f32 %v1310, 0.0
      %v1393 = vmax.f32 %v1315, 0.0
      %v1394 = vmax.f32 %v1320, 0.0
      %v1395 = vmax.f32 %v1325, 0.0
      %v1396 = vmax.f32 %v1330, 0.0
      %v1397 = vmax.f32 %v1335, 0.0
      %v1398 = vmax.f32 %v1340, 0.0
      %v1399 = vmax.f32 %v1345, 0.0
      %v1400 = vmax.f32 %v1350, 0.0
      %v1401 = vmax.f32 %v1355, 0.0
      %v1402 = vmax.f32 %v1360, 0.0
      %v1403 = vmax.f32 %v1365, 0.0
      %v1404 = vmax.f32 %v1370, 0.0
      %1405 = vst [vmem:[#allocation2 + $0x8] sm:$0xff] %v1373
      %1406 = vst [vmem:[#allocation2 + $0x10] sm:$0xff] %v1374
      %1407 = vst [vmem:[#allocation2 + $0x20] sm:$0xff] %v1375
      %1408 = vst [vmem:[#allocation2 + $0x28] sm:$0xff] %v1376
      %1409 = vst [vmem:[#allocation2 + $0x38] sm:$0xff] %v1377
      %1410 = vst [vmem:[#allocation2 + $0x40] sm:$0xff] %v1378
      %1411 = vst [vmem:[#allocation2 + $0x50] sm:$0xff] %v1379
      %1412 = vst [vmem:[#allocation2 + $0x58] sm:$0xff] %v1380
      %1413 = vst [vmem:[#allocation2 + $0x68] sm:$0xff] %v1381
      %1414 = vst [vmem:[#allocation2 + $0x70] sm:$0xff] %v1382
      %1415 = vst [vmem:[#allocation2 + $0x80] sm:$0xff] %v1383
      %1416 = vst [vmem:[#allocation2 + $0x88] sm:$0xff] %v1384
      %1417 = vst [vmem:[#allocation2 + $0x98] sm:$0xff] %v1385
      %1418 = vst [vmem:[#allocation2 + $0xa0] sm:$0xff] %v1386
      %1419 = vst [vmem:[#allocation2 + $0xb0] sm:$0xff] %v1387
      %1420 = vst [vmem:[#allocation2 + $0xb8] sm:$0xff] %v1388
      %1421 = vst [vmem:[#allocation2 + $0xc8] sm:$0xff] %v1389
      %1422 = vst [vmem:[#allocation2 + $0xd0] sm:$0xff] %v1390
      %1423 = vst [vmem:[#allocation2 + $0xe0] sm:$0xff] %v1391
      %1424 = vst [vmem:[#allocation2 + $0xe8] sm:$0xff] %v1392
      %1425 = vst [vmem:[#allocation2 + $0xf8] sm:$0xff] %v1393
      %1426 = vst [vmem:[#allocation2 + $0x100] sm:$0xff] %v1394
      %1427 = vst [vmem:[#allocation2 + $0x110] sm:$0xff] %v1395
      %1428 = vst [vmem:[#allocation2 + $0x118] sm:$0xff] %v1396
      %1429 = vst [vmem:[#allocation2 + $0x128] sm:$0xff] %v1397
      %1430 = vst [vmem:[#allocation2 + $0x130] sm:$0xff] %v1398
      %1431 = vst [vmem:[#allocation2 + $0x140] sm:$0xff] %v1399
      %1432 = vst [vmem:[#allocation2 + $0x148] sm:$0xff] %v1400
      %1433 = vst [vmem:[#allocation2 + $0x158] sm:$0xff] %v1401
      %1434 = vst [vmem:[#allocation2 + $0x160] sm:$0xff] %v1402
      %1435 = vst [vmem:[#allocation2 + $0x170] sm:$0xff] %v1403
      %1436 = vst [vmem:[#allocation2 + $0x178] sm:$0xff] %v1404
      %v1437 = vld [vmem:[#allocation2 + $0x4] sm:$0xff]
      %v1438 = vld [vmem:[#allocation2 + $0xc] sm:$0xff]
      %v1439 = vld [vmem:[#allocation2 + $0x1c] sm:$0xff]
      %v1440 = vld [vmem:[#allocation2 + $0x24] sm:$0xff]
      %v1441 = vld [vmem:[#allocation2 + $0x34] sm:$0xff]
      %v1442 = vld [vmem:[#allocation2 + $0x3c] sm:$0xff]
      %v1443 = vld [vmem:[#allocation2 + $0x4c] sm:$0xff]
      %v1444 = vld [vmem:[#allocation2 + $0x54] sm:$0xff]
      %v1445 = vld [vmem:[#allocation2 + $0x64] sm:$0xff]
      %v1446 = vld [vmem:[#allocation2 + $0x6c] sm:$0xff]
      %v1447 = vld [vmem:[#allocation2 + $0x7c] sm:$0xff]
      %v1448 = vld [vmem:[#allocation2 + $0x84] sm:$0xff]
      %v1449 = vld [vmem:[#allocation2 + $0x94] sm:$0xff]
      %v1450 = vld [vmem:[#allocation2 + $0x9c] sm:$0xff]
      %v1451 = vld [vmem:[#allocation2 + $0xac] sm:$0xff]
      %v1452 = vld [vmem:[#allocation2 + $0xb4] sm:$0xff]
      %v1453 = vld [vmem:[#allocation2 + $0xc4] sm:$0xff]
      %v1454 = vld [vmem:[#allocation2 + $0xcc] sm:$0xff]
      %v1455 = vld [vmem:[#allocation2 + $0xdc] sm:$0xff]
      %v1456 = vld [vmem:[#allocation2 + $0xe4] sm:$0xff]
      %v1457 = vld [vmem:[#allocation2 + $0xf4] sm:$0xff]
      %v1458 = vld [vmem:[#allocation2 + $0xfc] sm:$0xff]
      %v1459 = vld [vmem:[#allocation2 + $0x10c] sm:$0xff]
      %v1460 = vld [vmem:[#allocation2 + $0x114] sm:$0xff]
      %v1461 = vld [vmem:[#allocation2 + $0x124] sm:$0xff]
      %v1462 = vld [vmem:[#allocation2 + $0x12c] sm:$0xff]
      %v1463 = vld [vmem:[#allocation2 + $0x13c] sm:$0xff]
      %v1464 = vld [vmem:[#allocation2 + $0x144] sm:$0xff]
      %v1465 = vld [vmem:[#allocation2 + $0x154] sm:$0xff]
      %v1466 = vld [vmem:[#allocation2 + $0x15c] sm:$0xff]
      %v1467 = vld [vmem:[#allocation2 + $0x16c] sm:$0xff]
      %v1468 = vld [vmem:[#allocation2 + $0x174] sm:$0xff]
      %v1469 = vld [vmem:[#allocation2 + $0x6] sm:$0xff]
      %v1470 = vld [vmem:[#allocation2 + $0xe] sm:$0xff]
      %v1471 = vld [vmem:[#allocation2 + $0x1e] sm:$0xff]
      %v1472 = vld [vmem:[#allocation2 + $0x26] sm:$0xff]
      %v1473 = vld [vmem:[#allocation2 + $0x36] sm:$0xff]
      %v1474 = vld [vmem:[#allocation2 + $0x3e] sm:$0xff]
      %v1475 = vld [vmem:[#allocation2 + $0x4e] sm:$0xff]
      %v1476 = vld [vmem:[#allocation2 + $0x56] sm:$0xff]
      %v1477 = vld [vmem:[#allocation2 + $0x66] sm:$0xff]
      %v1478 = vld [vmem:[#allocation2 + $0x6e] sm:$0xff]
      %v1479 = vld [vmem:[#allocation2 + $0x7e] sm:$0xff]
      %v1480 = vld [vmem:[#allocation2 + $0x86] sm:$0xff]
      %v1481 = vld [vmem:[#allocation2 + $0x96] sm:$0xff]
      %v1482 = vld [vmem:[#allocation2 + $0x9e] sm:$0xff]
      %v1483 = vld [vmem:[#allocation2 + $0xae] sm:$0xff]
      %v1484 = vld [vmem:[#allocation2 + $0xb6] sm:$0xff]
      %v1485 = vld [vmem:[#allocation2 + $0xc6] sm:$0xff]
      %v1486 = vld [vmem:[#allocation2 + $0xce] sm:$0xff]
      %v1487 = vld [vmem:[#allocation2 + $0xde] sm:$0xff]
      %v1488 = vld [vmem:[#allocation2 + $0xe6] sm:$0xff]
      %v1489 = vld [vmem:[#allocation2 + $0xf6] sm:$0xff]
      %v1490 = vld [vmem:[#allocation2 + $0xfe] sm:$0xff]
      %v1491 = vld [vmem:[#allocation2 + $0x10e] sm:$0xff]
      %v1492 = vld [vmem:[#allocation2 + $0x116] sm:$0xff]
      %v1493 = vld [vmem:[#allocation2 + $0x126] sm:$0xff]
      %v1494 = vld [vmem:[#allocation2 + $0x12e] sm:$0xff]
      %v1495 = vld [vmem:[#allocation2 + $0x13e] sm:$0xff]
      %v1496 = vld [vmem:[#allocation2 + $0x146] sm:$0xff]
      %v1497 = vld [vmem:[#allocation2 + $0x156] sm:$0xff]
      %v1498 = vld [vmem:[#allocation2 + $0x15e] sm:$0xff]
      %v1499 = vld [vmem:[#allocation2 + $0x16e] sm:$0xff]
      %v1500 = vld [vmem:[#allocation2 + $0x176] sm:$0xff]
      %v1501 = vld [vmem:[#allocation2 + $0x8] sm:$0xff]
      %v1502 = vld [vmem:[#allocation2 + $0x10] sm:$0xff]
      %v1503 = vld [vmem:[#allocation2 + $0x20] sm:$0xff]
      %v1504 = vld [vmem:[#allocation2 + $0x28] sm:$0xff]
      %v1505 = vld [vmem:[#allocation2 + $0x38] sm:$0xff]
      %v1506 = vld [vmem:[#allocation2 + $0x40] sm:$0xff]
      %v1507 = vld [vmem:[#allocation2 + $0x50] sm:$0xff]
      %v1508 = vld [vmem:[#allocation2 + $0x58] sm:$0xff]
      %v1509 = vld [vmem:[#allocation2 + $0x68] sm:$0xff]
      %v1510 = vld [vmem:[#allocation2 + $0x70] sm:$0xff]
      %v1511 = vld [vmem:[#allocation2 + $0x80] sm:$0xff]
      %v1512 = vld [vmem:[#allocation2 + $0x88] sm:$0xff]
      %v1513 = vld [vmem:[#allocation2 + $0x98] sm:$0xff]
      %v1514 = vld [vmem:[#allocation2 + $0xa0] sm:$0xff]
      %v1515 = vld [vmem:[#allocation2 + $0xb0] sm:$0xff]
      %v1516 = vld [vmem:[#allocation2 + $0xb8] sm:$0xff]
      %v1517 = vld [vmem:[#allocation2 + $0xc8] sm:$0xff]
      %v1518 = vld [vmem:[#allocation2 + $0xd0] sm:$0xff]
      %v1519 = vld [vmem:[#allocation2 + $0xe0] sm:$0xff]
      %v1520 = vld [vmem:[#allocation2 + $0xe8] sm:$0xff]
      %v1521 = vld [vmem:[#allocation2 + $0xf8] sm:$0xff]
      %v1522 = vld [vmem:[#allocation2 + $0x100] sm:$0xff]
      %v1523 = vld [vmem:[#allocation2 + $0x110] sm:$0xff]
      %v1524 = vld [vmem:[#allocation2 + $0x118] sm:$0xff]
      %v1525 = vld [vmem:[#allocation2 + $0x128] sm:$0xff]
      %v1526 = vld [vmem:[#allocation2 + $0x130] sm:$0xff]
      %v1527 = vld [vmem:[#allocation2 + $0x140] sm:$0xff]
      %v1528 = vld [vmem:[#allocation2 + $0x148] sm:$0xff]
      %v1529 = vld [vmem:[#allocation2 + $0x158] sm:$0xff]
      %v1530 = vld [vmem:[#allocation2 + $0x160] sm:$0xff]
      %v1531 = vld [vmem:[#allocation2 + $0x170] sm:$0xff]
      %v1532 = vld [vmem:[#allocation2 + $0x178] sm:$0xff]
      %s1533 = scalar_lea.vmem %s4, 384
      %v1534 = vld [vmem:[%s1533] sm:$0xff]
      %v1535 = vld [vmem:[%s1533 + $0x8] sm:$0xff]
      %v1536 = vld [vmem:[%s1533 + $0x10] sm:$0xff]
      %v1537 = vld [vmem:[%s1533 + $0x18] sm:$0xff]
      %v1538 = vld [vmem:[%s1533 + $0x20] sm:$0xff]
      %v1539 = vld [vmem:[%s1533 + $0x28] sm:$0xff]
      %v1540 = vld [vmem:[%s1533 + $0x30] sm:$0xff]
      %v1541 = vld [vmem:[%s1533 + $0x38] sm:$0xff]
      %v1542 = vld [vmem:[%s1533 + $0x40] sm:$0xff]
      %v1543 = vld [vmem:[%s1533 + $0x48] sm:$0xff]
      %v1544 = vld [vmem:[%s1533 + $0x50] sm:$0xff]
      %v1545 = vld [vmem:[%s1533 + $0x58] sm:$0xff]
      %v1546 = vld [vmem:[%s1533 + $0x60] sm:$0xff]
      %v1547 = vld [vmem:[%s1533 + $0x68] sm:$0xff]
      %v1548 = vld [vmem:[%s1533 + $0x70] sm:$0xff]
      %v1549 = vld [vmem:[%s1533 + $0x78] sm:$0xff]
      %v1550 = vld [vmem:[%s1533 + $0x80] sm:$0xff]
      %v1551 = vld [vmem:[%s1533 + $0x88] sm:$0xff]
      %v1552 = vld [vmem:[%s1533 + $0x90] sm:$0xff]
      %v1553 = vld [vmem:[%s1533 + $0x98] sm:$0xff]
      %v1554 = vld [vmem:[%s1533 + $0xa0] sm:$0xff]
      %v1555 = vld [vmem:[%s1533 + $0xa8] sm:$0xff]
      %v1556 = vld [vmem:[%s1533 + $0xb0] sm:$0xff]
      %v1557 = vld [vmem:[%s1533 + $0xb8] sm:$0xff]
      %v1558 = vld [vmem:[%s1533 + $0xc0] sm:$0xff]
      %v1559 = vld [vmem:[%s1533 + $0xc8] sm:$0xff]
      %v1560 = vld [vmem:[%s1533 + $0xd0] sm:$0xff]
      %v1561 = vld [vmem:[%s1533 + $0xd8] sm:$0xff]
      %v1562 = vld [vmem:[%s1533 + $0xe0] sm:$0xff]
      %v1563 = vld [vmem:[%s1533 + $0xe8] sm:$0xff]
      %v1564 = vld [vmem:[%s1533 + $0xf0] sm:$0xff]
      %v1565 = vld [vmem:[%s1533 + $0xf8] sm:$0xff]
      %v1566 = vld [vmem:[%s1533 + $0x100] sm:$0xff]
      %v1567 = vld [vmem:[%s1533 + $0x108] sm:$0xff]
      %v1568 = vld [vmem:[%s1533 + $0x110] sm:$0xff]
      %v1569 = vld [vmem:[%s1533 + $0x118] sm:$0xff]
      %v1570 = vld [vmem:[%s1533 + $0x120] sm:$0xff]
      %v1571 = vld [vmem:[%s1533 + $0x128] sm:$0xff]
      %v1572 = vld [vmem:[%s1533 + $0x130] sm:$0xff]
      %v1573 = vld [vmem:[%s1533 + $0x138] sm:$0xff]
      %v1574 = vld [vmem:[%s1533 + $0x140] sm:$0xff]
      %v1575 = vld [vmem:[%s1533 + $0x148] sm:$0xff]
      %v1576 = vld [vmem:[%s1533 + $0x150] sm:$0xff]
      %v1577 = vld [vmem:[%s1533 + $0x158] sm:$0xff]
      %v1578 = vld [vmem:[%s1533 + $0x160] sm:$0xff]
      %v1579 = vld [vmem:[%s1533 + $0x168] sm:$0xff]
      %v1580 = vld [vmem:[%s1533 + $0x170] sm:$0xff]
      %v1581 = vld [vmem:[%s1533 + $0x178] sm:$0xff]
      %s1582 = scalar_lea.vmem %s5, 1
      %v1583 = vld [vmem:[%s1582] sm:$0x1]
      %v1585 = vlaneseq
      %v1586 = vshrl.u32 %v1585, 7
      %v1587 = vsub.s32 0, %v1586
      %v1588 = vrot.slane %v1583, %v1587
      %1590 = vmatprep.subr.mxu0 0.0
      %1591 = vmatpush1.msra.mxu0 %v1549
      %1592 = vmatprep.subr.mxu0 0.0
      %1593 = vmatpush1.msra.mxu0 %v1548
      %1594 = vmatprep.subr.mxu0 0.0
      %1595 = vmatpush1.msra.mxu0 %v1547
      %1596 = vmatprep.subr.mxu0 0.0
      %1597 = vmatpush1.msra.mxu0 %v1546
      %1598 = vmatprep.subr.mxu0 0.0
      %1599 = vmatpush1.msra.mxu0 %v1545
      %1600 = vmatprep.subr.mxu0 0.0
      %1601 = vmatpush1.msra.mxu0 %v1544
      %1602 = vmatprep.subr.mxu0 0.0
      %1603 = vmatpush1.msra.mxu0 %v1543
      %1604 = vmatprep.subr.mxu0 0.0
      %1605 = vmatpush1.msra.mxu0 %v1542
      %1606 = vmatprep.subr.mxu0 0.0
      %1607 = vmatpush1.msra.mxu0 %v1541
      %1608 = vmatprep.subr.mxu0 0.0
      %1609 = vmatpush1.msra.mxu0 %v1540
      %1610 = vmatprep.subr.mxu0 0.0
      %1611 = vmatpush1.msra.mxu0 %v1539
      %1612 = vmatprep.subr.mxu0 0.0
      %1613 = vmatpush1.msra.mxu0 %v1538
      %1614 = vmatprep.subr.mxu0 0.0
      %1615 = vmatpush1.msra.mxu0 %v1537
      %1616 = vmatprep.subr.mxu0 0.0
      %1617 = vmatpush1.msra.mxu0 %v1536
      %1618 = vmatprep.subr.mxu0 0.0
      %1619 = vmatpush1.msra.mxu0 %v1535
      %1620 = vmatprep.subr.mxu0 0.0
      %1621 = vmatpush1.msra.mxu0 %v1534
      %1622 = vmatprep.subr.mxu0 0.0
      %1623 = vmatpush2.msra.mxu0 %v1565
      %1624 = vmatprep.subr.mxu0 0.0
      %1625 = vmatpush2.msra.mxu0 %v1564
      %1626 = vmatprep.subr.mxu0 0.0
      %1627 = vmatpush2.msra.mxu0 %v1563
      %1628 = vmatprep.subr.mxu0 0.0
      %1629 = vmatpush2.msra.mxu0 %v1562
      %1630 = vmatprep.subr.mxu0 0.0
      %1631 = vmatpush2.msra.mxu0 %v1561
      %1632 = vmatprep.subr.mxu0 0.0
      %1633 = vmatpush2.msra.mxu0 %v1560
      %1634 = vmatprep.subr.mxu0 0.0
      %1635 = vmatpush2.msra.mxu0 %v1559
      %1636 = vmatprep.subr.mxu0 0.0
      %1637 = vmatpush2.msra.mxu0 %v1558
      %1638 = vmatprep.subr.mxu0 0.0
      %1639 = vmatpush2.msra.mxu0 %v1557
      %1640 = vmatprep.subr.mxu0 0.0
      %1641 = vmatpush2.msra.mxu0 %v1556
      %1642 = vmatprep.subr.mxu0 0.0
      %1643 = vmatpush2.msra.mxu0 %v1555
      %1644 = vmatprep.subr.mxu0 0.0
      %1645 = vmatpush2.msra.mxu0 %v1554
      %1646 = vmatprep.subr.mxu0 0.0
      %1647 = vmatpush2.msra.mxu0 %v1553
      %1648 = vmatprep.subr.mxu0 0.0
      %1649 = vmatpush2.msra.mxu0 %v1552
      %1650 = vmatprep.subr.mxu0 0.0
      %1651 = vmatpush2.msra.mxu0 %v1551
      %1652 = vmatprep.subr.mxu0 0.0
      %1653 = vmatpush2.msra.mxu0 %v1550
      %1654 = vmatprep.mubr.f32.mxu0 %v1469
      %1655 = vmatmul.mubr.f32.gmra.mxu0 %v1437
      %v1656 = vpop.f32.mrf.mxu0
      %v1657 = vadd.f32 %v1588, %v1656
      %v1658 = vpop.f32.mrf.mxu0
      %1659 = vmatprep.mubr.f32.mxu0 %v1470
      %1660 = vmatmul.mubr.f32.gmra.mxu0 %v1438
      %v1661 = vpop.f32.mrf.mxu0
      %v1662 = vadd.f32 %v1588, %v1661
      %v1663 = vpop.f32.mrf.mxu0
      %1664 = vmatprep.mubr.f32.mxu0 %v1471
      %1665 = vmatmul.mubr.f32.gmra.mxu0 %v1439
      %v1666 = vpop.f32.mrf.mxu0
      %v1667 = vadd.f32 %v1588, %v1666
      %v1668 = vpop.f32.mrf.mxu0
      %1669 = vmatprep.mubr.f32.mxu0 %v1472
      %1670 = vmatmul.mubr.f32.gmra.mxu0 %v1440
      %v1671 = vpop.f32.mrf.mxu0
      %v1672 = vadd.f32 %v1588, %v1671
      %v1673 = vpop.f32.mrf.mxu0
      %1674 = vmatprep.mubr.f32.mxu0 %v1473
      %1675 = vmatmul.mubr.f32.gmra.mxu0 %v1441
      %v1676 = vpop.f32.mrf.mxu0
      %v1677 = vadd.f32 %v1588, %v1676
      %v1678 = vpop.f32.mrf.mxu0
      %1679 = vmatprep.mubr.f32.mxu0 %v1474
      %1680 = vmatmul.mubr.f32.gmra.mxu0 %v1442
      %v1681 = vpop.f32.mrf.mxu0
      %v1682 = vadd.f32 %v1588, %v1681
      %v1683 = vpop.f32.mrf.mxu0
      %1684 = vmatprep.mubr.f32.mxu0 %v1475
      %1685 = vmatmul.mubr.f32.gmra.mxu0 %v1443
      %v1686 = vpop.f32.mrf.mxu0
      %v1687 = vadd.f32 %v1588, %v1686
      %v1688 = vpop.f32.mrf.mxu0
      %1689 = vmatprep.mubr.f32.mxu0 %v1476
      %1690 = vmatmul.mubr.f32.gmra.mxu0 %v1444
      %v1691 = vpop.f32.mrf.mxu0
      %v1692 = vadd.f32 %v1588, %v1691
      %v1693 = vpop.f32.mrf.mxu0
      %1694 = vmatprep.mubr.f32.mxu0 %v1477
      %1695 = vmatmul.mubr.f32.gmra.mxu0 %v1445
      %v1696 = vpop.f32.mrf.mxu0
      %v1697 = vadd.f32 %v1588, %v1696
      %v1698 = vpop.f32.mrf.mxu0
      %1699 = vmatprep.mubr.f32.mxu0 %v1478
      %1700 = vmatmul.mubr.f32.gmra.mxu0 %v1446
      %v1701 = vpop.f32.mrf.mxu0
      %v1702 = vadd.f32 %v1588, %v1701
      %v1703 = vpop.f32.mrf.mxu0
      %1704 = vmatprep.mubr.f32.mxu0 %v1479
      %1705 = vmatmul.mubr.f32.gmra.mxu0 %v1447
      %v1706 = vpop.f32.mrf.mxu0
      %v1707 = vadd.f32 %v1588, %v1706
      %v1708 = vpop.f32.mrf.mxu0
      %1709 = vmatprep.mubr.f32.mxu0 %v1480
      %1710 = vmatmul.mubr.f32.gmra.mxu0 %v1448
      %v1711 = vpop.f32.mrf.mxu0
      %v1712 = vadd.f32 %v1588, %v1711
      %v1713 = vpop.f32.mrf.mxu0
      %1714 = vmatprep.mubr.f32.mxu0 %v1481
      %1715 = vmatmul.mubr.f32.gmra.mxu0 %v1449
      %v1716 = vpop.f32.mrf.mxu0
      %v1717 = vadd.f32 %v1588, %v1716
      %v1718 = vpop.f32.mrf.mxu0
      %1719 = vmatprep.mubr.f32.mxu0 %v1482
      %1720 = vmatmul.mubr.f32.gmra.mxu0 %v1450
      %v1721 = vpop.f32.mrf.mxu0
      %v1722 = vadd.f32 %v1588, %v1721
      %v1723 = vpop.f32.mrf.mxu0
      %1724 = vmatprep.mubr.f32.mxu0 %v1483
      %1725 = vmatmul.mubr.f32.gmra.mxu0 %v1451
      %v1726 = vpop.f32.mrf.mxu0
      %v1727 = vadd.f32 %v1588, %v1726
      %v1728 = vpop.f32.mrf.mxu0
      %1729 = vmatprep.mubr.f32.mxu0 %v1484
      %1730 = vmatmul.mubr.f32.gmra.mxu0 %v1452
      %v1731 = vpop.f32.mrf.mxu0
      %v1732 = vadd.f32 %v1588, %v1731
      %v1733 = vpop.f32.mrf.mxu0
      %1734 = vmatprep.mubr.f32.mxu0 %v1485
      %1735 = vmatmul.mubr.f32.gmra.mxu0 %v1453
      %v1736 = vpop.f32.mrf.mxu0
      %v1737 = vadd.f32 %v1588, %v1736
      %v1738 = vpop.f32.mrf.mxu0
      %1739 = vmatprep.mubr.f32.mxu0 %v1486
      %1740 = vmatmul.mubr.f32.gmra.mxu0 %v1454
      %v1741 = vpop.f32.mrf.mxu0
      %v1742 = vadd.f32 %v1588, %v1741
      %v1743 = vpop.f32.mrf.mxu0
      %1744 = vmatprep.mubr.f32.mxu0 %v1487
      %1745 = vmatmul.mubr.f32.gmra.mxu0 %v1455
      %v1746 = vpop.f32.mrf.mxu0
      %v1747 = vadd.f32 %v1588, %v1746
      %v1748 = vpop.f32.mrf.mxu0
      %1749 = vmatprep.mubr.f32.mxu0 %v1488
      %1750 = vmatmul.mubr.f32.gmra.mxu0 %v1456
      %v1751 = vpop.f32.mrf.mxu0
      %v1752 = vadd.f32 %v1588, %v1751
      %v1753 = vpop.f32.mrf.mxu0
      %1754 = vmatprep.mubr.f32.mxu0 %v1489
      %1755 = vmatmul.mubr.f32.gmra.mxu0 %v1457
      %v1756 = vpop.f32.mrf.mxu0
      %v1757 = vadd.f32 %v1588, %v1756
      %v1758 = vpop.f32.mrf.mxu0
      %1759 = vmatprep.mubr.f32.mxu0 %v1490
      %1760 = vmatmul.mubr.f32.gmra.mxu0 %v1458
      %v1761 = vpop.f32.mrf.mxu0
      %v1762 = vadd.f32 %v1588, %v1761
      %v1763 = vpop.f32.mrf.mxu0
      %1764 = vmatprep.mubr.f32.mxu0 %v1491
      %1765 = vmatmul.mubr.f32.gmra.mxu0 %v1459
      %v1766 = vpop.f32.mrf.mxu0
      %v1767 = vadd.f32 %v1588, %v1766
      %v1768 = vpop.f32.mrf.mxu0
      %1769 = vmatprep.mubr.f32.mxu0 %v1492
      %1770 = vmatmul.mubr.f32.gmra.mxu0 %v1460
      %v1771 = vpop.f32.mrf.mxu0
      %v1772 = vadd.f32 %v1588, %v1771
      %v1773 = vpop.f32.mrf.mxu0
      %1774 = vmatprep.mubr.f32.mxu0 %v1493
      %1775 = vmatmul.mubr.f32.gmra.mxu0 %v1461
      %v1776 = vpop.f32.mrf.mxu0
      %v1777 = vadd.f32 %v1588, %v1776
      %v1778 = vpop.f32.mrf.mxu0
      %1779 = vmatprep.mubr.f32.mxu0 %v1494
      %1780 = vmatmul.mubr.f32.gmra.mxu0 %v1462
      %v1781 = vpop.f32.mrf.mxu0
      %v1782 = vadd.f32 %v1588, %v1781
      %v1783 = vpop.f32.mrf.mxu0
      %1784 = vmatprep.mubr.f32.mxu0 %v1495
      %1785 = vmatmul.mubr.f32.gmra.mxu0 %v1463
      %v1786 = vpop.f32.mrf.mxu0
      %v1787 = vadd.f32 %v1588, %v1786
      %v1788 = vpop.f32.mrf.mxu0
      %1789 = vmatprep.mubr.f32.mxu0 %v1496
      %1790 = vmatmul.mubr.f32.gmra.mxu0 %v1464
      %v1791 = vpop.f32.mrf.mxu0
      %v1792 = vadd.f32 %v1588, %v1791
      %v1793 = vpop.f32.mrf.mxu0
      %1794 = vmatprep.mubr.f32.mxu0 %v1497
      %1795 = vmatmul.mubr.f32.gmra.mxu0 %v1465
      %v1796 = vpop.f32.mrf.mxu0
      %v1797 = vadd.f32 %v1588, %v1796
      %v1798 = vpop.f32.mrf.mxu0
      %1799 = vmatprep.mubr.f32.mxu0 %v1498
      %1800 = vmatmul.mubr.f32.gmra.mxu0 %v1466
      %v1801 = vpop.f32.mrf.mxu0
      %v1802 = vadd.f32 %v1588, %v1801
      %v1803 = vpop.f32.mrf.mxu0
      %1804 = vmatprep.mubr.f32.mxu0 %v1499
      %1805 = vmatmul.mubr.f32.gmra.mxu0 %v1467
      %v1806 = vpop.f32.mrf.mxu0
      %v1807 = vadd.f32 %v1588, %v1806
      %v1808 = vpop.f32.mrf.mxu0
      %1809 = vmatprep.mubr.f32.mxu0 %v1500
      %1810 = vmatmul.mubr.f32.gmra.mxu0 %v1468
      %v1811 = vpop.f32.mrf.mxu0
      %v1812 = vadd.f32 %v1588, %v1811
      %v1813 = vpop.f32.mrf.mxu0
      %1814 = vdwg.mxu0
      %1815 = vmatprep.subr.mxu0 0.0
      %1816 = vmatpush1.msra.mxu0 %v1581
      %1817 = vmatprep.subr.mxu0 0.0
      %1818 = vmatpush1.msra.mxu0 %v1580
      %1819 = vmatprep.subr.mxu0 0.0
      %1820 = vmatpush1.msra.mxu0 %v1579
      %1821 = vmatprep.subr.mxu0 0.0
      %1822 = vmatpush1.msra.mxu0 %v1578
      %1823 = vmatprep.subr.mxu0 0.0
      %1824 = vmatpush1.msra.mxu0 %v1577
      %1825 = vmatprep.subr.mxu0 0.0
      %1826 = vmatpush1.msra.mxu0 %v1576
      %1827 = vmatprep.subr.mxu0 0.0
      %1828 = vmatpush1.msra.mxu0 %v1575
      %1829 = vmatprep.subr.mxu0 0.0
      %1830 = vmatpush1.msra.mxu0 %v1574
      %1831 = vmatprep.subr.mxu0 0.0
      %1832 = vmatpush1.msra.mxu0 %v1573
      %1833 = vmatprep.subr.mxu0 0.0
      %1834 = vmatpush1.msra.mxu0 %v1572
      %1835 = vmatprep.subr.mxu0 0.0
      %1836 = vmatpush1.msra.mxu0 %v1571
      %1837 = vmatprep.subr.mxu0 0.0
      %1838 = vmatpush1.msra.mxu0 %v1570
      %1839 = vmatprep.subr.mxu0 0.0
      %1840 = vmatpush1.msra.mxu0 %v1569
      %1841 = vmatprep.subr.mxu0 0.0
      %1842 = vmatpush1.msra.mxu0 %v1568
      %1843 = vmatprep.subr.mxu0 0.0
      %1844 = vmatpush1.msra.mxu0 %v1567
      %1845 = vmatprep.subr.mxu0 0.0
      %1846 = vmatpush1.msra.mxu0 %v1566
      %1847 = vmatprep.subr.mxu0 0.0
      %1848 = vmatpush2.msra.mxu0 0.0
      %1849 = vmatprep.subr.mxu0 0.0
      %1850 = vmatpush2.msra.mxu0 0.0
      %1851 = vmatprep.subr.mxu0 0.0
      %1852 = vmatpush2.msra.mxu0 0.0
      %1853 = vmatprep.subr.mxu0 0.0
      %1854 = vmatpush2.msra.mxu0 0.0
      %1855 = vmatprep.subr.mxu0 0.0
      %1856 = vmatpush2.msra.mxu0 0.0
      %1857 = vmatprep.subr.mxu0 0.0
      %1858 = vmatpush2.msra.mxu0 0.0
      %1859 = vmatprep.subr.mxu0 0.0
      %1860 = vmatpush2.msra.mxu0 0.0
      %1861 = vmatprep.subr.mxu0 0.0
      %1862 = vmatpush2.msra.mxu0 0.0
      %1863 = vmatprep.subr.mxu0 0.0
      %1864 = vmatpush2.msra.mxu0 0.0
      %1865 = vmatprep.subr.mxu0 0.0
      %1866 = vmatpush2.msra.mxu0 0.0
      %1867 = vmatprep.subr.mxu0 0.0
      %1868 = vmatpush2.msra.mxu0 0.0
      %1869 = vmatprep.subr.mxu0 0.0
      %1870 = vmatpush2.msra.mxu0 0.0
      %1871 = vmatprep.subr.mxu0 0.0
      %1872 = vmatpush2.msra.mxu0 0.0
      %1873 = vmatprep.subr.mxu0 0.0
      %1874 = vmatpush2.msra.mxu0 0.0
      %1875 = vmatprep.subr.mxu0 0.0
      %1876 = vmatpush2.msra.mxu0 0.0
      %1877 = vmatprep.subr.mxu0 0.0
      %1878 = vmatpush2.msra.mxu0 0.0
      %1879 = vmatprep.mubr.f32.mxu0 0.0
      %1880 = vmatmul.mubr.f32.gmra.mxu0 %v1501
      %v1881 = vpop.f32.mrf.mxu0
      %v1882 = vadd.f32 %v1657, %v1881
      %v1883 = vpop.f32.mrf.mxu0
      %1884 = vmatprep.mubr.f32.mxu0 0.0
      %1885 = vmatmul.mubr.f32.gmra.mxu0 %v1502
      %v1886 = vpop.f32.mrf.mxu0
      %v1887 = vadd.f32 %v1662, %v1886
      %v1888 = vpop.f32.mrf.mxu0
      %1889 = vmatprep.mubr.f32.mxu0 0.0
      %1890 = vmatmul.mubr.f32.gmra.mxu0 %v1503
      %v1891 = vpop.f32.mrf.mxu0
      %v1892 = vadd.f32 %v1667, %v1891
      %v1893 = vpop.f32.mrf.mxu0
      %1894 = vmatprep.mubr.f32.mxu0 0.0
      %1895 = vmatmul.mubr.f32.gmra.mxu0 %v1504
      %v1896 = vpop.f32.mrf.mxu0
      %v1897 = vadd.f32 %v1672, %v1896
      %v1898 = vpop.f32.mrf.mxu0
      %1899 = vmatprep.mubr.f32.mxu0 0.0
      %1900 = vmatmul.mubr.f32.gmra.mxu0 %v1505
      %v1901 = vpop.f32.mrf.mxu0
      %v1902 = vadd.f32 %v1677, %v1901
      %v1903 = vpop.f32.mrf.mxu0
      %1904 = vmatprep.mubr.f32.mxu0 0.0
      %1905 = vmatmul.mubr.f32.gmra.mxu0 %v1506
      %v1906 = vpop.f32.mrf.mxu0
      %v1907 = vadd.f32 %v1682, %v1906
      %v1908 = vpop.f32.mrf.mxu0
      %1909 = vmatprep.mubr.f32.mxu0 0.0
      %1910 = vmatmul.mubr.f32.gmra.mxu0 %v1507
      %v1911 = vpop.f32.mrf.mxu0
      %v1912 = vadd.f32 %v1687, %v1911
      %v1913 = vpop.f32.mrf.mxu0
      %1914 = vmatprep.mubr.f32.mxu0 0.0
      %1915 = vmatmul.mubr.f32.gmra.mxu0 %v1508
      %v1916 = vpop.f32.mrf.mxu0
      %v1917 = vadd.f32 %v1692, %v1916
      %v1918 = vpop.f32.mrf.mxu0
      %1919 = vmatprep.mubr.f32.mxu0 0.0
      %1920 = vmatmul.mubr.f32.gmra.mxu0 %v1509
      %v1921 = vpop.f32.mrf.mxu0
      %v1922 = vadd.f32 %v1697, %v1921
      %v1923 = vpop.f32.mrf.mxu0
      %1924 = vmatprep.mubr.f32.mxu0 0.0
      %1925 = vmatmul.mubr.f32.gmra.mxu0 %v1510
      %v1926 = vpop.f32.mrf.mxu0
      %v1927 = vadd.f32 %v1702, %v1926
      %v1928 = vpop.f32.mrf.mxu0
      %1929 = vmatprep.mubr.f32.mxu0 0.0
      %1930 = vmatmul.mubr.f32.gmra.mxu0 %v1511
      %v1931 = vpop.f32.mrf.mxu0
      %v1932 = vadd.f32 %v1707, %v1931
      %v1933 = vpop.f32.mrf.mxu0
      %1934 = vmatprep.mubr.f32.mxu0 0.0
      %1935 = vmatmul.mubr.f32.gmra.mxu0 %v1512
      %v1936 = vpop.f32.mrf.mxu0
      %v1937 = vadd.f32 %v1712, %v1936
      %v1938 = vpop.f32.mrf.mxu0
      %1939 = vmatprep.mubr.f32.mxu0 0.0
      %1940 = vmatmul.mubr.f32.gmra.mxu0 %v1513
      %v1941 = vpop.f32.mrf.mxu0
      %v1942 = vadd.f32 %v1717, %v1941
      %v1943 = vpop.f32.mrf.mxu0
      %1944 = vmatprep.mubr.f32.mxu0 0.0
      %1945 = vmatmul.mubr.f32.gmra.mxu0 %v1514
      %v1946 = vpop.f32.mrf.mxu0
      %v1947 = vadd.f32 %v1722, %v1946
      %v1948 = vpop.f32.mrf.mxu0
      %1949 = vmatprep.mubr.f32.mxu0 0.0
      %1950 = vmatmul.mubr.f32.gmra.mxu0 %v1515
      %v1951 = vpop.f32.mrf.mxu0
      %v1952 = vadd.f32 %v1727, %v1951
      %v1953 = vpop.f32.mrf.mxu0
      %1954 = vmatprep.mubr.f32.mxu0 0.0
      %1955 = vmatmul.mubr.f32.gmra.mxu0 %v1516
      %v1956 = vpop.f32.mrf.mxu0
      %v1957 = vadd.f32 %v1732, %v1956
      %v1958 = vpop.f32.mrf.mxu0
      %1959 = vmatprep.mubr.f32.mxu0 0.0
      %1960 = vmatmul.mubr.f32.gmra.mxu0 %v1517
      %v1961 = vpop.f32.mrf.mxu0
      %v1962 = vadd.f32 %v1737, %v1961
      %v1963 = vpop.f32.mrf.mxu0
      %1964 = vmatprep.mubr.f32.mxu0 0.0
      %1965 = vmatmul.mubr.f32.gmra.mxu0 %v1518
      %v1966 = vpop.f32.mrf.mxu0
      %v1967 = vadd.f32 %v1742, %v1966
      %v1968 = vpop.f32.mrf.mxu0
      %1969 = vmatprep.mubr.f32.mxu0 0.0
      %1970 = vmatmul.mubr.f32.gmra.mxu0 %v1519
      %v1971 = vpop.f32.mrf.mxu0
      %v1972 = vadd.f32 %v1747, %v1971
      %v1973 = vpop.f32.mrf.mxu0
      %1974 = vmatprep.mubr.f32.mxu0 0.0
      %1975 = vmatmul.mubr.f32.gmra.mxu0 %v1520
      %v1976 = vpop.f32.mrf.mxu0
      %v1977 = vadd.f32 %v1752, %v1976
      %v1978 = vpop.f32.mrf.mxu0
      %1979 = vmatprep.mubr.f32.mxu0 0.0
      %1980 = vmatmul.mubr.f32.gmra.mxu0 %v1521
      %v1981 = vpop.f32.mrf.mxu0
      %v1982 = vadd.f32 %v1757, %v1981
      %v1983 = vpop.f32.mrf.mxu0
      %1984 = vmatprep.mubr.f32.mxu0 0.0
      %1985 = vmatmul.mubr.f32.gmra.mxu0 %v1522
      %v1986 = vpop.f32.mrf.mxu0
      %v1987 = vadd.f32 %v1762, %v1986
      %v1988 = vpop.f32.mrf.mxu0
      %1989 = vmatprep.mubr.f32.mxu0 0.0
      %1990 = vmatmul.mubr.f32.gmra.mxu0 %v1523
      %v1991 = vpop.f32.mrf.mxu0
      %v1992 = vadd.f32 %v1767, %v1991
      %v1993 = vpop.f32.mrf.mxu0
      %1994 = vmatprep.mubr.f32.mxu0 0.0
      %1995 = vmatmul.mubr.f32.gmra.mxu0 %v1524
      %v1996 = vpop.f32.mrf.mxu0
      %v1997 = vadd.f32 %v1772, %v1996
      %v1998 = vpop.f32.mrf.mxu0
      %1999 = vmatprep.mubr.f32.mxu0 0.0
      %2000 = vmatmul.mubr.f32.gmra.mxu0 %v1525
      %v2001 = vpop.f32.mrf.mxu0
      %v2002 = vadd.f32 %v1777, %v2001
      %v2003 = vpop.f32.mrf.mxu0
      %2004 = vmatprep.mubr.f32.mxu0 0.0
      %2005 = vmatmul.mubr.f32.gmra.mxu0 %v1526
      %v2006 = vpop.f32.mrf.mxu0
      %v2007 = vadd.f32 %v1782, %v2006
      %v2008 = vpop.f32.mrf.mxu0
      %2009 = vmatprep.mubr.f32.mxu0 0.0
      %2010 = vmatmul.mubr.f32.gmra.mxu0 %v1527
      %v2011 = vpop.f32.mrf.mxu0
      %v2012 = vadd.f32 %v1787, %v2011
      %v2013 = vpop.f32.mrf.mxu0
      %2014 = vmatprep.mubr.f32.mxu0 0.0
      %2015 = vmatmul.mubr.f32.gmra.mxu0 %v1528
      %v2016 = vpop.f32.mrf.mxu0
      %v2017 = vadd.f32 %v1792, %v2016
      %v2018 = vpop.f32.mrf.mxu0
      %2019 = vmatprep.mubr.f32.mxu0 0.0
      %2020 = vmatmul.mubr.f32.gmra.mxu0 %v1529
      %v2021 = vpop.f32.mrf.mxu0
      %v2022 = vadd.f32 %v1797, %v2021
      %v2023 = vpop.f32.mrf.mxu0
      %2024 = vmatprep.mubr.f32.mxu0 0.0
      %2025 = vmatmul.mubr.f32.gmra.mxu0 %v1530
      %v2026 = vpop.f32.mrf.mxu0
      %v2027 = vadd.f32 %v1802, %v2026
      %v2028 = vpop.f32.mrf.mxu0
      %2029 = vmatprep.mubr.f32.mxu0 0.0
      %2030 = vmatmul.mubr.f32.gmra.mxu0 %v1531
      %v2031 = vpop.f32.mrf.mxu0
      %v2032 = vadd.f32 %v1807, %v2031
      %v2033 = vpop.f32.mrf.mxu0
      %2034 = vmatprep.mubr.f32.mxu0 0.0
      %2035 = vmatmul.mubr.f32.gmra.mxu0 %v1532
      %v2036 = vpop.f32.mrf.mxu0
      %v2037 = vadd.f32 %v1812, %v2036
      %v2038 = vpop.f32.mrf.mxu0
      %2039 = vdwg.mxu0
      %v2040 = vmax.f32 %v1882, 0.0
      %v2041 = vmax.f32 %v1887, 0.0
      %v2042 = vmax.f32 %v1892, 0.0
      %v2043 = vmax.f32 %v1897, 0.0
      %v2044 = vmax.f32 %v1902, 0.0
      %v2045 = vmax.f32 %v1907, 0.0
      %v2046 = vmax.f32 %v1912, 0.0
      %v2047 = vmax.f32 %v1917, 0.0
      %v2048 = vmax.f32 %v1922, 0.0
      %v2049 = vmax.f32 %v1927, 0.0
      %v2050 = vmax.f32 %v1932, 0.0
      %v2051 = vmax.f32 %v1937, 0.0
      %v2052 = vmax.f32 %v1942, 0.0
      %v2053 = vmax.f32 %v1947, 0.0
      %v2054 = vmax.f32 %v1952, 0.0
      %v2055 = vmax.f32 %v1957, 0.0
      %v2056 = vmax.f32 %v1962, 0.0
      %v2057 = vmax.f32 %v1967, 0.0
      %v2058 = vmax.f32 %v1972, 0.0
      %v2059 = vmax.f32 %v1977, 0.0
      %v2060 = vmax.f32 %v1982, 0.0
      %v2061 = vmax.f32 %v1987, 0.0
      %v2062 = vmax.f32 %v1992, 0.0
      %v2063 = vmax.f32 %v1997, 0.0
      %v2064 = vmax.f32 %v2002, 0.0
      %v2065 = vmax.f32 %v2007, 0.0
      %v2066 = vmax.f32 %v2012, 0.0
      %v2067 = vmax.f32 %v2017, 0.0
      %v2068 = vmax.f32 %v2022, 0.0
      %v2069 = vmax.f32 %v2027, 0.0
      %v2070 = vmax.f32 %v2032, 0.0
      %v2071 = vmax.f32 %v2037, 0.0
      %2072 = vst [vmem:[#allocation2 + $0x8] sm:$0xff] %v2040
      %2073 = vst [vmem:[#allocation2 + $0x10] sm:$0xff] %v2041
      %2074 = vst [vmem:[#allocation2 + $0x20] sm:$0xff] %v2042
      %2075 = vst [vmem:[#allocation2 + $0x28] sm:$0xff] %v2043
      %2076 = vst [vmem:[#allocation2 + $0x38] sm:$0xff] %v2044
      %2077 = vst [vmem:[#allocation2 + $0x40] sm:$0xff] %v2045
      %2078 = vst [vmem:[#allocation2 + $0x50] sm:$0xff] %v2046
      %2079 = vst [vmem:[#allocation2 + $0x58] sm:$0xff] %v2047
      %2080 = vst [vmem:[#allocation2 + $0x68] sm:$0xff] %v2048
      %2081 = vst [vmem:[#allocation2 + $0x70] sm:$0xff] %v2049
      %2082 = vst [vmem:[#allocation2 + $0x80] sm:$0xff] %v2050
      %2083 = vst [vmem:[#allocation2 + $0x88] sm:$0xff] %v2051
      %2084 = vst [vmem:[#allocation2 + $0x98] sm:$0xff] %v2052
      %2085 = vst [vmem:[#allocation2 + $0xa0] sm:$0xff] %v2053
      %2086 = vst [vmem:[#allocation2 + $0xb0] sm:$0xff] %v2054
      %2087 = vst [vmem:[#allocation2 + $0xb8] sm:$0xff] %v2055
      %2088 = vst [vmem:[#allocation2 + $0xc8] sm:$0xff] %v2056
      %2089 = vst [vmem:[#allocation2 + $0xd0] sm:$0xff] %v2057
      %2090 = vst [vmem:[#allocation2 + $0xe0] sm:$0xff] %v2058
      %2091 = vst [vmem:[#allocation2 + $0xe8] sm:$0xff] %v2059
      %2092 = vst [vmem:[#allocation2 + $0xf8] sm:$0xff] %v2060
      %2093 = vst [vmem:[#allocation2 + $0x100] sm:$0xff] %v2061
      %2094 = vst [vmem:[#allocation2 + $0x110] sm:$0xff] %v2062
      %2095 = vst [vmem:[#allocation2 + $0x118] sm:$0xff] %v2063
      %2096 = vst [vmem:[#allocation2 + $0x128] sm:$0xff] %v2064
      %2097 = vst [vmem:[#allocation2 + $0x130] sm:$0xff] %v2065
      %2098 = vst [vmem:[#allocation2 + $0x140] sm:$0xff] %v2066
      %2099 = vst [vmem:[#allocation2 + $0x148] sm:$0xff] %v2067
      %2100 = vst [vmem:[#allocation2 + $0x158] sm:$0xff] %v2068
      %2101 = vst [vmem:[#allocation2 + $0x160] sm:$0xff] %v2069
      %2102 = vst [vmem:[#allocation2 + $0x170] sm:$0xff] %v2070
      %2103 = vst [vmem:[#allocation2 + $0x178] sm:$0xff] %v2071
      %v2104 = vld [vmem:[#allocation2 + $0x17] sm:$0x1]
      %v2105 = vld [vmem:[#allocation2 + $0x2f] sm:$0x1]
      %v2106 = vld [vmem:[#allocation2 + $0x47] sm:$0x1]
      %v2107 = vld [vmem:[#allocation2 + $0x5f] sm:$0x1]
      %v2108 = vld [vmem:[#allocation2 + $0x77] sm:$0x1]
      %v2109 = vld [vmem:[#allocation2 + $0x8f] sm:$0x1]
      %v2110 = vld [vmem:[#allocation2 + $0xa7] sm:$0x1]
      %v2111 = vld [vmem:[#allocation2 + $0xbf] sm:$0x1]
      %v2112 = vld [vmem:[#allocation2 + $0xd7] sm:$0x1]
      %v2113 = vld [vmem:[#allocation2 + $0xef] sm:$0x1]
      %v2114 = vld [vmem:[#allocation2 + $0x107] sm:$0x1]
      %v2115 = vld [vmem:[#allocation2 + $0x11f] sm:$0x1]
      %v2116 = vld [vmem:[#allocation2 + $0x137] sm:$0x1]
      %v2117 = vld [vmem:[#allocation2 + $0x14f] sm:$0x1]
      %v2118 = vld [vmem:[#allocation2 + $0x167] sm:$0x1]
      %v2119 = vld [vmem:[#allocation2 + $0x17f] sm:$0x1]
      %v2120 = vld [vmem:[%s7] sm:$0xff]
      %v2121 = vld [vmem:[%s7 + $0x8] sm:$0xff]
      %v2122 = vld [vmem:[%s7 + $0x10] sm:$0xff]
      %v2123 = vld [vmem:[%s7 + $0x18] sm:$0xff]
      %v2124 = vld [vmem:[%s7 + $0x20] sm:$0xff]
      %v2125 = vld [vmem:[%s7 + $0x28] sm:$0xff]
      %v2126 = vld [vmem:[%s7 + $0x30] sm:$0xff]
      %v2127 = vld [vmem:[%s7 + $0x38] sm:$0xff]
      %v2128 = vld [vmem:[%s7 + $0x40] sm:$0xff]
      %v2129 = vld [vmem:[%s7 + $0x48] sm:$0xff]
      %v2130 = vld [vmem:[%s7 + $0x50] sm:$0xff]
      %v2131 = vld [vmem:[%s7 + $0x58] sm:$0xff]
      %v2132 = vld [vmem:[%s7 + $0x60] sm:$0xff]
      %v2133 = vld [vmem:[%s7 + $0x68] sm:$0xff]
      %v2134 = vld [vmem:[%s7 + $0x70] sm:$0xff]
      %v2135 = vld [vmem:[%s7 + $0x78] sm:$0xff]
      %v2152 = vrot.slane %v2105, 7
      %vm2153 = vcmask 1041409
      %v2154 = vsel %vm2153, %v2152, %v2104
      %v2155 = vrot.slane %v2106, 6
      %vm2156 = vcmask 1042434
      %v2157 = vsel %vm2156, %v2155, %v2154
      %v2158 = vrot.slane %v2107, 5
      %vm2159 = vcmask 1043459
      %v2160 = vsel %vm2159, %v2158, %v2157
      %v2161 = vrot.slane %v2108, 4
      %vm2162 = vcmask 1044484
      %v2163 = vsel %vm2162, %v2161, %v2160
      %v2164 = vrot.slane %v2109, 3
      %vm2165 = vcmask 1045509
      %v2166 = vsel %vm2165, %v2164, %v2163
      %v2167 = vrot.slane %v2110, 2
      %vm2168 = vcmask 1046534
      %v2169 = vsel %vm2168, %v2167, %v2166
      %v2170 = vrot.slane %v2111, 1
      %vm2171 = vcmask 1047559
      %v2172 = vsel %vm2171, %v2170, %v2169
      %v2173 = vrot.slane %v2113, 7
      %v2174 = vsel %vm2153, %v2173, %v2112
      %v2175 = vrot.slane %v2114, 6
      %v2176 = vsel %vm2156, %v2175, %v2174
      %v2177 = vrot.slane %v2115, 5
      %v2178 = vsel %vm2159, %v2177, %v2176
      %v2179 = vrot.slane %v2116, 4
      %v2180 = vsel %vm2162, %v2179, %v2178
      %v2181 = vrot.slane %v2117, 3
      %v2182 = vsel %vm2165, %v2181, %v2180
      %v2183 = vrot.slane %v2118, 2
      %v2184 = vsel %vm2168, %v2183, %v2182
      %v2185 = vrot.slane %v2119, 1
      %v2186 = vsel %vm2171, %v2185, %v2184
      %2189 = vmatprep.subr.mxu0 0.0
      %2190 = vmatpush1.msra.mxu0 %v2135
      %2191 = vmatprep.subr.mxu0 0.0
      %2192 = vmatpush1.msra.mxu0 %v2134
      %2193 = vmatprep.subr.mxu0 0.0
      %2194 = vmatpush1.msra.mxu0 %v2133
      %2195 = vmatprep.subr.mxu0 0.0
      %2196 = vmatpush1.msra.mxu0 %v2132
      %2197 = vmatprep.subr.mxu0 0.0
      %2198 = vmatpush1.msra.mxu0 %v2131
      %2199 = vmatprep.subr.mxu0 0.0
      %2200 = vmatpush1.msra.mxu0 %v2130
      %2201 = vmatprep.subr.mxu0 0.0
      %2202 = vmatpush1.msra.mxu0 %v2129
      %2203 = vmatprep.subr.mxu0 0.0
      %2204 = vmatpush1.msra.mxu0 %v2128
      %2205 = vmatprep.subr.mxu0 0.0
      %2206 = vmatpush1.msra.mxu0 %v2127
      %2207 = vmatprep.subr.mxu0 0.0
      %2208 = vmatpush1.msra.mxu0 %v2126
      %2209 = vmatprep.subr.mxu0 0.0
      %2210 = vmatpush1.msra.mxu0 %v2125
      %2211 = vmatprep.subr.mxu0 0.0
      %2212 = vmatpush1.msra.mxu0 %v2124
      %2213 = vmatprep.subr.mxu0 0.0
      %2214 = vmatpush1.msra.mxu0 %v2123
      %2215 = vmatprep.subr.mxu0 0.0
      %2216 = vmatpush1.msra.mxu0 %v2122
      %2217 = vmatprep.subr.mxu0 0.0
      %2218 = vmatpush1.msra.mxu0 %v2121
      %2219 = vmatprep.subr.mxu0 0.0
      %2220 = vmatpush1.msra.mxu0 %v2120
      %2221 = vmatprep.subr.mxu0 0.0
      %2222 = vmatpush2.msra.mxu0 0.0
      %2223 = vmatprep.subr.mxu0 0.0
      %2224 = vmatpush2.msra.mxu0 0.0
      %2225 = vmatprep.subr.mxu0 0.0
      %2226 = vmatpush2.msra.mxu0 0.0
      %2227 = vmatprep.subr.mxu0 0.0
      %2228 = vmatpush2.msra.mxu0 0.0
      %2229 = vmatprep.subr.mxu0 0.0
      %2230 = vmatpush2.msra.mxu0 0.0
      %2231 = vmatprep.subr.mxu0 0.0
      %2232 = vmatpush2.msra.mxu0 0.0
      %2233 = vmatprep.subr.mxu0 0.0
      %2234 = vmatpush2.msra.mxu0 0.0
      %2235 = vmatprep.subr.mxu0 0.0
      %2236 = vmatpush2.msra.mxu0 0.0
      %2237 = vmatprep.subr.mxu0 0.0
      %2238 = vmatpush2.msra.mxu0 0.0
      %2239 = vmatprep.subr.mxu0 0.0
      %2240 = vmatpush2.msra.mxu0 0.0
      %2241 = vmatprep.subr.mxu0 0.0
      %2242 = vmatpush2.msra.mxu0 0.0
      %2243 = vmatprep.subr.mxu0 0.0
      %2244 = vmatpush2.msra.mxu0 0.0
      %2245 = vmatprep.subr.mxu0 0.0
      %2246 = vmatpush2.msra.mxu0 0.0
      %2247 = vmatprep.subr.mxu0 0.0
      %2248 = vmatpush2.msra.mxu0 0.0
      %2249 = vmatprep.subr.mxu0 0.0
      %2250 = vmatpush2.msra.mxu0 0.0
      %2251 = vmatprep.subr.mxu0 0.0
      %2252 = vmatpush2.msra.mxu0 0.0
      %2253 = vmatprep.mubr.f32.mxu0 0.0
      %2254 = vmatmul.mubr.f32.gmra.mxu0 %v2172
      %v2255 = vpop.f32.mrf.mxu0
      %v2256 = vadd.f32 0.0, %v2255
      %v2257 = vpop.f32.mrf.mxu0
      %2258 = vmatprep.mubr.f32.mxu0 0.0
      %2259 = vmatmul.mubr.f32.gmra.mxu0 %v2186
      %v2260 = vpop.f32.mrf.mxu0
      %v2261 = vadd.f32 0.0, %v2260
      %v2262 = vpop.f32.mrf.mxu0
      %2263 = vdwg.mxu0
      %v2264 = vld [vmem:[%s350] sm:$0x3f]
      %v2265 = vld [vmem:[%s350 + $0x8] sm:$0x3f]
      %v2266 = vld [vmem:[%s350 + $0x10] sm:$0x3f]
      %v2267 = vld [vmem:[%s350 + $0x18] sm:$0x3f]
      %v2268 = vld [vmem:[%s350 + $0x20] sm:$0x3f]
      %v2269 = vld [vmem:[%s350 + $0x28] sm:$0x3f]
      %v2270 = vld [vmem:[%s350 + $0x30] sm:$0x3f]
      %v2271 = vld [vmem:[%s350 + $0x38] sm:$0x3f]
      %v2272 = vld [vmem:[%s350 + $0x40] sm:$0x3f]
      %v2273 = vld [vmem:[%s350 + $0x48] sm:$0x3f]
      %v2274 = vld [vmem:[%s350 + $0x50] sm:$0x3f]
      %v2275 = vld [vmem:[%s350 + $0x58] sm:$0x3f]
      %v2276 = vld [vmem:[%s350 + $0x60] sm:$0x3f]
      %v2277 = vld [vmem:[%s350 + $0x68] sm:$0x3f]
      %v2278 = vld [vmem:[%s350 + $0x70] sm:$0x3f]
      %v2279 = vld [vmem:[%s350 + $0x78] sm:$0x3f]
      %v2280 = vld [vmem:[%s6] sm:$0x3f]
      %v2281 = vmul.f32 %v2264, %v2280
      %v2282 = vmul.f32 %v2265, %v2280
      %v2283 = vmul.f32 %v2266, %v2280
      %v2284 = vmul.f32 %v2267, %v2280
      %v2285 = vmul.f32 %v2268, %v2280
      %v2286 = vmul.f32 %v2269, %v2280
      %v2287 = vmul.f32 %v2270, %v2280
      %v2288 = vmul.f32 %v2271, %v2280
      %v2289 = vmul.f32 %v2272, %v2280
      %v2290 = vmul.f32 %v2273, %v2280
      %v2291 = vmul.f32 %v2274, %v2280
      %v2292 = vmul.f32 %v2275, %v2280
      %v2293 = vmul.f32 %v2276, %v2280
      %v2294 = vmul.f32 %v2277, %v2280
      %v2295 = vmul.f32 %v2278, %v2280
      %v2296 = vmul.f32 %v2279, %v2280
      %v2297 = vsel %vm511, %v2281, 0.0
      %v2298 = vrot.slane %v2297, 4
      %v2299 = vadd.f32 %v2297, %v2298
      %v2300 = vrot.slane %v2299, 2
      %v2301 = vadd.f32 %v2299, %v2300
      %v2302 = vrot.slane %v2301, 1
      %v2303 = vadd.f32 %v2301, %v2302
      %v2304 = vsel %vm511, %v2282, 0.0
      %v2305 = vrot.slane %v2304, 4
      %v2306 = vadd.f32 %v2304, %v2305
      %v2307 = vrot.slane %v2306, 2
      %v2308 = vadd.f32 %v2306, %v2307
      %v2309 = vrot.slane %v2308, 1
      %v2310 = vadd.f32 %v2308, %v2309
      %v2311 = vsel %vm511, %v2283, 0.0
      %v2312 = vrot.slane %v2311, 4
      %v2313 = vadd.f32 %v2311, %v2312
      %v2314 = vrot.slane %v2313, 2
      %v2315 = vadd.f32 %v2313, %v2314
      %v2316 = vrot.slane %v2315, 1
      %v2317 = vadd.f32 %v2315, %v2316
      %v2318 = vsel %vm511, %v2284, 0.0
      %v2319 = vrot.slane %v2318, 4
      %v2320 = vadd.f32 %v2318, %v2319
      %v2321 = vrot.slane %v2320, 2
      %v2322 = vadd.f32 %v2320, %v2321
      %v2323 = vrot.slane %v2322, 1
      %v2324 = vadd.f32 %v2322, %v2323
      %v2325 = vsel %vm511, %v2285, 0.0
      %v2326 = vrot.slane %v2325, 4
      %v2327 = vadd.f32 %v2325, %v2326
      %v2328 = vrot.slane %v2327, 2
      %v2329 = vadd.f32 %v2327, %v2328
      %v2330 = vrot.slane %v2329, 1
      %v2331 = vadd.f32 %v2329, %v2330
      %v2332 = vsel %vm511, %v2286, 0.0
      %v2333 = vrot.slane %v2332, 4
      %v2334 = vadd.f32 %v2332, %v2333
      %v2335 = vrot.slane %v2334, 2
      %v2336 = vadd.f32 %v2334, %v2335
      %v2337 = vrot.slane %v2336, 1
      %v2338 = vadd.f32 %v2336, %v2337
      %v2339 = vsel %vm511, %v2287, 0.0
      %v2340 = vrot.slane %v2339, 4
      %v2341 = vadd.f32 %v2339, %v2340
      %v2342 = vrot.slane %v2341, 2
      %v2343 = vadd.f32 %v2341, %v2342
      %v2344 = vrot.slane %v2343, 1
      %v2345 = vadd.f32 %v2343, %v2344
      %v2346 = vsel %vm511, %v2288, 0.0
      %v2347 = vrot.slane %v2346, 4
      %v2348 = vadd.f32 %v2346, %v2347
      %v2349 = vrot.slane %v2348, 2
      %v2350 = vadd.f32 %v2348, %v2349
      %v2351 = vrot.slane %v2350, 1
      %v2352 = vadd.f32 %v2350, %v2351
      %v2353 = vsel %vm511, %v2289, 0.0
      %v2354 = vrot.slane %v2353, 4
      %v2355 = vadd.f32 %v2353, %v2354
      %v2356 = vrot.slane %v2355, 2
      %v2357 = vadd.f32 %v2355, %v2356
      %v2358 = vrot.slane %v2357, 1
      %v2359 = vadd.f32 %v2357, %v2358
      %v2360 = vsel %vm511, %v2290, 0.0
      %v2361 = vrot.slane %v2360, 4
      %v2362 = vadd.f32 %v2360, %v2361
      %v2363 = vrot.slane %v2362, 2
      %v2364 = vadd.f32 %v2362, %v2363
      %v2365 = vrot.slane %v2364, 1
      %v2366 = vadd.f32 %v2364, %v2365
      %v2367 = vsel %vm511, %v2291, 0.0
      %v2368 = vrot.slane %v2367, 4
      %v2369 = vadd.f32 %v2367, %v2368
      %v2370 = vrot.slane %v2369, 2
      %v2371 = vadd.f32 %v2369, %v2370
      %v2372 = vrot.slane %v2371, 1
      %v2373 = vadd.f32 %v2371, %v2372
      %v2374 = vsel %vm511, %v2292, 0.0
      %v2375 = vrot.slane %v2374, 4
      %v2376 = vadd.f32 %v2374, %v2375
      %v2377 = vrot.slane %v2376, 2
      %v2378 = vadd.f32 %v2376, %v2377
      %v2379 = vrot.slane %v2378, 1
      %v2380 = vadd.f32 %v2378, %v2379
      %v2381 = vsel %vm511, %v2293, 0.0
      %v2382 = vrot.slane %v2381, 4
      %v2383 = vadd.f32 %v2381, %v2382
      %v2384 = vrot.slane %v2383, 2
      %v2385 = vadd.f32 %v2383, %v2384
      %v2386 = vrot.slane %v2385, 1
      %v2387 = vadd.f32 %v2385, %v2386
      %v2388 = vsel %vm511, %v2294, 0.0
      %v2389 = vrot.slane %v2388, 4
      %v2390 = vadd.f32 %v2388, %v2389
      %v2391 = vrot.slane %v2390, 2
      %v2392 = vadd.f32 %v2390, %v2391
      %v2393 = vrot.slane %v2392, 1
      %v2394 = vadd.f32 %v2392, %v2393
      %v2395 = vsel %vm511, %v2295, 0.0
      %v2396 = vrot.slane %v2395, 4
      %v2397 = vadd.f32 %v2395, %v2396
      %v2398 = vrot.slane %v2397, 2
      %v2399 = vadd.f32 %v2397, %v2398
      %v2400 = vrot.slane %v2399, 1
      %v2401 = vadd.f32 %v2399, %v2400
      %v2402 = vsel %vm511, %v2296, 0.0
      %v2403 = vrot.slane %v2402, 4
      %v2404 = vadd.f32 %v2402, %v2403
      %v2405 = vrot.slane %v2404, 2
      %v2406 = vadd.f32 %v2404, %v2405
      %v2407 = vrot.slane %v2406, 1
      %v2408 = vadd.f32 %v2406, %v2407
      %v2411 = vrot.slane %v2256, 1
      %v2412 = vrot.slane %v2256, 2
      %v2413 = vrot.slane %v2256, 3
      %v2414 = vrot.slane %v2256, 4
      %v2415 = vrot.slane %v2256, 5
      %v2416 = vrot.slane %v2256, 6
      %v2417 = vrot.slane %v2256, 7
      %v2418 = vrot.slane %v2261, 1
      %v2419 = vrot.slane %v2261, 2
      %v2420 = vrot.slane %v2261, 3
      %v2421 = vrot.slane %v2261, 4
      %v2422 = vrot.slane %v2261, 5
      %v2423 = vrot.slane %v2261, 6
      %v2424 = vrot.slane %v2261, 7
      %v2441 = vadd.f32 %v2303, %v2256
      %v2442 = vadd.f32 %v2310, %v2411
      %v2443 = vadd.f32 %v2317, %v2412
      %v2444 = vadd.f32 %v2324, %v2413
      %v2445 = vadd.f32 %v2331, %v2414
      %v2446 = vadd.f32 %v2338, %v2415
      %v2447 = vadd.f32 %v2345, %v2416
      %v2448 = vadd.f32 %v2352, %v2417
      %v2449 = vadd.f32 %v2359, %v2261
      %v2450 = vadd.f32 %v2366, %v2418
      %v2451 = vadd.f32 %v2373, %v2419
      %v2452 = vadd.f32 %v2380, %v2420
      %v2453 = vadd.f32 %v2387, %v2421
      %v2454 = vadd.f32 %v2394, %v2422
      %v2455 = vadd.f32 %v2401, %v2423
      %v2456 = vadd.f32 %v2408, %v2424
      %v2457 = vld [vmem:[%s8] sm:$0x1]
      %v2459 = vlaneseq
      %v2460 = vshrl.u32 %v2459, 7
      %v2461 = vsub.s32 0, %v2460
      %v2462 = vrot.slane %v2457, %v2461
      %v2464 = vadd.f32 %v2441, %v2462
      %v2465 = vadd.f32 %v2442, %v2462
      %v2466 = vadd.f32 %v2443, %v2462
      %v2467 = vadd.f32 %v2444, %v2462
      %v2468 = vadd.f32 %v2445, %v2462
      %v2469 = vadd.f32 %v2446, %v2462
      %v2470 = vadd.f32 %v2447, %v2462
      %v2471 = vadd.f32 %v2448, %v2462
      %v2472 = vadd.f32 %v2449, %v2462
      %v2473 = vadd.f32 %v2450, %v2462
      %v2474 = vadd.f32 %v2451, %v2462
      %v2475 = vadd.f32 %v2452, %v2462
      %v2476 = vadd.f32 %v2453, %v2462
      %v2477 = vadd.f32 %v2454, %v2462
      %v2478 = vadd.f32 %v2455, %v2462
      %v2479 = vadd.f32 %v2456, %v2462
      %v2496 = vrot.slane %v2465, 7
      %v2497 = vsel %vm2153, %v2496, %v2464
      %v2498 = vrot.slane %v2466, 6
      %v2499 = vsel %vm2156, %v2498, %v2497
      %v2500 = vrot.slane %v2467, 5
      %v2501 = vsel %vm2159, %v2500, %v2499
      %v2502 = vrot.slane %v2468, 4
      %v2503 = vsel %vm2162, %v2502, %v2501
      %v2504 = vrot.slane %v2469, 3
      %v2505 = vsel %vm2165, %v2504, %v2503
      %v2506 = vrot.slane %v2470, 2
      %v2507 = vsel %vm2168, %v2506, %v2505
      %v2508 = vrot.slane %v2471, 1
      %v2509 = vsel %vm2171, %v2508, %v2507
      %v2510 = vrot.slane %v2473, 7
      %v2511 = vsel %vm2153, %v2510, %v2472
      %v2512 = vrot.slane %v2474, 6
      %v2513 = vsel %vm2156, %v2512, %v2511
      %v2514 = vrot.slane %v2475, 5
      %v2515 = vsel %vm2159, %v2514, %v2513
      %v2516 = vrot.slane %v2476, 4
      %v2517 = vsel %vm2162, %v2516, %v2515
      %v2518 = vrot.slane %v2477, 3
      %v2519 = vsel %vm2165, %v2518, %v2517
      %v2520 = vrot.slane %v2478, 2
      %v2521 = vsel %vm2168, %v2520, %v2519
      %v2522 = vrot.slane %v2479, 1
      %v2523 = vsel %vm2171, %v2522, %v2521
      %2526 = vst [vmem:[%s356] sm:$0xff] %v2509
      %2527 = vst [vmem:[%s356 + $0x8] sm:$0xff] %v2523
      %s2528 = smul.u32 2, %s20
      %p2529 = scmp.lt.s32.totalorder %s2528, 3
      %s2530 = scalar_select %p2529, %s2528, 3
      %s2531 = smul.addr %s2530, 8
      %s2532 = scalar_lea.vmem %s9, %s2531
      // Predicated region
      $region57: #{tcn_forward.1} parent=55 // pred_check
        %p2533 = pneg %p237
      $region58: #{tcn_forward.1} parent=55 // pred_check_branch
        %2535 = sbr.rel (%p2533) target = $region60
      $region59: #{tcn_forward.1} parent=55 // pred_region
        %s2536 = smul.u32 2, %s20
      $region60: #{tcn_forward.1} parent=55 // pred_fallthru
        _
    $region56: #{tcn_forward.1} parent=5 // pred_fallthru
      _
    %p2537 = scmp.le.s32.totalorder 2, %s15
    // Predicated region
    $region61: #{tcn_forward.1} parent=5 // pred_check
      %p2538 = pneg %p2537
    $region62: #{tcn_forward.1} parent=5 // pred_check_branch
      %2540 = sbr.rel (%p2538) target = $region64
    $region63: #{tcn_forward.1} parent=5 // pred_region
      %s2541 = ssub.s32 %s15, 2
      // Predicated region
      $region65: #{tcn_forward.1} parent=63 // pred_check
        %p2542 = pneg %p243
      $region66: #{tcn_forward.1} parent=63 // pred_check_branch
        %2544 = sbr.rel (%p2542) target = $region68
      $region67: #{tcn_forward.1} parent=63 // pred_region
        %s2545 = smul.u32 2, %s21
        %p2546 = scmp.lt.s32.totalorder %s2545, 3
        %s2547 = scalar_select %p2546, %s2545, 3
        %s2548 = smul.addr %s2547, 8
        %s2549 = scalar_lea.vmem %s9, %s2548
      $region68: #{tcn_forward.1} parent=63 // pred_fallthru
        _
    $region64: #{tcn_forward.1} parent=5 // pred_fallthru
      _
  $region6: #{tcn_forward.1} parent=0 // loop_footer
    %s19 = sadd.s32 1, %s15
  $region7: #{tcn_forward.1} parent=0 // loop_footer_branch
    %14 = sbr.rel target = $region3
  $region8: #{tcn_forward.1} parent=0 // loop_exit
    _

</llo_original>
